<compile_context>
chip_gen: v7x
topology: tpu7x:2x2x1
jax: 0.10.0
libtpu: 0.0.40
codegen_flags: <defaults>
</compile_context>

<pallas_src>
import functools

import numpy as np
import jax
import jax.numpy as jnp
from jax.experimental import pallas as pl
from jax.experimental.pallas import tpu as pltpu


NUM_CLASSES = 10
N_AUG = 32
NOISE_STD = 0.005
LANES = 128


# ----------------------------------------------------------------------------
# IAST thresholding (host-side numpy, exactly as in the reference)
# ----------------------------------------------------------------------------
def ias_thresh(conf_dict, alpha, n=10, w=None, gamma=1.0):
    if w is None:
        w = np.ones(n)
    cls_thresh = np.ones(n, dtype=np.float32)
    for idx_cls in np.arange(0, n):
        if conf_dict[idx_cls] is not None:
            arr = np.array(conf_dict[idx_cls])
            cls_thresh[idx_cls] = np.percentile(arr, 100 * (1 - alpha * w[idx_cls] ** gamma))
    return cls_thresh


def IAST(n, prob, pred):
    cls_thresh = np.ones(n) * 0.65
    logits_cls_dict = {c: [cls_thresh[c]] for c in range(n)}
    for cls in range(n):
        logits_cls_dict[cls].extend(prob[pred == cls].astype(np.float16))
    alpha, beta, gamma = (0.4, 0.5, 7.0)
    tmp_cls_thresh = ias_thresh(logits_cls_dict, alpha=alpha, n=n, w=cls_thresh, gamma=gamma)
    cls_thresh = beta * cls_thresh + (1 - beta) * tmp_cls_thresh
    cls_thresh[cls_thresh >= 1] = 0.9
    return cls_thresh


def _softmax_np(x):
    x = x - x.max(axis=1, keepdims=True)
    e = np.exp(x)
    return e / e.sum(axis=1, keepdims=True)


# ----------------------------------------------------------------------------
# Kernel 1: fused forward
#   rows [0 : B)   -> logits of raw x against [w_student | w_teacher | 0 pad]
#   rows [B : 2B)  -> logits of the mean over N_AUG clipped/noised augmentations
# One launch, one MXU matmul, lane-dense (2B, 128) output.
# ----------------------------------------------------------------------------
def _fused_forward_kernel(x_ref, noise_ref, w_ref, b_ref, o_ref, *, noise_std):
    x = x_ref[...]                                   # (B, D)
    xc = jnp.clip(x, 0.0, 1.0)                       # Clip(0,1), hoisted out of the aug loop
    # TODO(synk): only Clip + GaussianNoise(0, std) + Clip of the TTA transform pipeline is
    # implemented; ColorJitterPro / pad / affine / blur / crop / hflip have no Pallas equivalent.
    aug = jnp.clip(xc[None, :, :] + noise_std * noise_ref[...], 0.0, 1.0)   # (N_AUG, B, D)
    # Linear head => mean over augmentations commutes with the matmul: 1 dot instead of N_AUG.
    x_aug_mean = jnp.mean(aug, axis=0)               # (B, D)
    xs = jnp.concatenate([x, x_aug_mean], axis=0)    # (2B, D): fill the MXU M axis
    o_ref[...] = (jnp.dot(xs, w_ref[...], preferred_element_type=jnp.float32)
                  + b_ref[...])


@functools.partial(jax.jit, static_argnames=("noise_std", "c_pad"))
def fused_forward(x_flat, noise, w_s, b_s, w_t, b_t, noise_std=NOISE_STD, c_pad=LANES):
    B, D = x_flat.shape
    C = w_s.shape[1]
    # Pack student + teacher weights into one lane-dense (D, 128) operand so output
    # stores are unmasked full-lane `vst` and both forwards share a single matmul.
    wcat = jnp.zeros((D, c_pad), jnp.float32)
    wcat = wcat.at[:, :C].set(w_s.astype(jnp.float32))
    wcat = wcat.at[:, C:2 * C].set(w_t.astype(jnp.float32))
    bcat = jnp.zeros((1, c_pad), jnp.float32)
    bcat = bcat.at[0, :C].set(b_s.astype(jnp.float32))
    bcat = bcat.at[0, C:2 * C].set(b_t.astype(jnp.float32))
    kernel = functools.partial(_fused_forward_kernel, noise_std=float(noise_std))
    return pl.pallas_call(
        kernel,
        out_shape=jax.ShapeDtypeStruct((2 * B, c_pad), jnp.float32),
    )(x_flat.astype(jnp.float32), noise.astype(jnp.float32), wcat, bcat)


# ----------------------------------------------------------------------------
# Kernel 2: fused EMA-teacher update + stochastic restore over ALL parameters,
# packed lane-dense as (rows, 128).  rst < 0 disables the restore branch.
# ----------------------------------------------------------------------------
def _ema_restore_kernel(rst_ref, ema_ref, p_ref, src_ref, rand_ref,
                        ema_out_ref, p_out_ref, *, alpha):
    p = p_ref[...]
    # EMA update uses post-SGD, pre-restore student params (same order as the reference).
    ema_out_ref[...] = alpha * ema_ref[...] + (1.0 - alpha) * p
    mask = (rand_ref[...] < rst_ref[0]).astype(jnp.float32)
    p_out_ref[...] = src_ref[...] * mask + p * (1.0 - mask)


@functools.partial(jax.jit, static_argnames=("alpha",))
def ema_and_restore(ema_flat, p_flat, src_flat, rand_flat, rst_arr, alpha):
    kernel = functools.partial(_ema_restore_kernel, alpha=float(alpha))
    shp = ema_flat.shape
    return pl.pallas_call(
        kernel,
        out_shape=(jax.ShapeDtypeStruct(shp, jnp.float32),
                   jax.ShapeDtypeStruct(shp, jnp.float32)),
        in_specs=[pl.BlockSpec(memory_space=pltpu.MemorySpace.SMEM),   # rst scalar
                  pl.BlockSpec(memory_space=pltpu.MemorySpace.VMEM),
                  pl.BlockSpec(memory_space=pltpu.MemorySpace.VMEM),
                  pl.BlockSpec(memory_space=pltpu.MemorySpace.VMEM),
                  pl.BlockSpec(memory_space=pltpu.MemorySpace.VMEM)],
        out_specs=(pl.BlockSpec(memory_space=pltpu.MemorySpace.VMEM),
                   pl.BlockSpec(memory_space=pltpu.MemorySpace.VMEM)),
    )(rst_arr, ema_flat, p_flat, src_flat, rand_flat)


# ----------------------------------------------------------------------------
# Loss (entropy vs teacher + mutual information) + SGD step (pure JAX, jitted)
# ----------------------------------------------------------------------------
@functools.partial(jax.jit, static_argnames=("lr",))
def sgd_adapt(params, x_flat, outputs_ema, lr):
    # TODO(synk): loss.backward() + optimizer.step() through the Pallas forward would need
    # custom_vjp; gradients are taken on this pure-JAX twin of the linear head + CoTTA loss.
    def loss_fn(p):
        out = x_flat @ p["w"] + p["b"]
        lsm = jax.nn.log_softmax(out, axis=1)
        sm = jnp.exp(lsm)
        sme = jax.nn.softmax(outputs_ema, axis=1)
        ent = -jnp.sum(sme * lsm, axis=1).mean()
        margin = jnp.mean(sm, axis=0)
        mi = -jnp.mean(jnp.sum(sm * (lsm - jnp.log(margin + 1e-5)), axis=1))
        return ent + mi

    loss, grads = jax.value_and_grad(loss_fn)(params)
    new_params = jax.tree_util.tree_map(lambda p, g: p - lr * g, params, grads)
    return loss, new_params


# ----------------------------------------------------------------------------
# CoTTA wrapper
# ----------------------------------------------------------------------------
class CoTTA:
    """CoTTA: entropy-minimizing test-time adaptation of a linear classifier."""

    def __init__(self, params, steps=1, episodic=False, mt_alpha=0.99, rst_m=0.1,
                 ap=0.9, lr=1e-2, seed=0):
        assert steps > 0, "cotta requires >= 1 step(s) to forward and update"
        self.steps = steps
        self.episodic = episodic
        self.mt = mt_alpha
        self.rst = rst_m
        self.ap = ap
        self.lr = lr
        self.params = {k: jnp.asarray(v, jnp.float32) for k, v in params.items()}
        self.D, self.C = self.params["w"].shape
        # lane-dense (rows, 128) packed-parameter layout used by the EMA/restore kernel
        total = self.D * self.C + self.C
        rows = -(-total // LANES)
        rows = ((rows + 7) // 8) * 8
        self._flat_rows = rows
        self._flat_total = total
        # copy_model_and_optimizer equivalents (jnp arrays are immutable copies)
        self.model_state = dict(self.params)
        self.ema_params = dict(self.params)
        self.anchor_params = dict(self.params)   # kept for parity; unused in forward
        self.optimizer_state = None              # plain SGD has no state
        self._src_flat = self._flatten(self.model_state)
        self.cnt, self.round, self.mean = 0, 0, 0
        self._step = 0
        self._key = jax.random.PRNGKey(seed)
        self.last_loss = None

    # --- (rows, 128) lane-dense packing of {w, b} ----------------------------
    def _flatten(self, p):
        flat = jnp.concatenate([jnp.reshape(p["w"], (-1,)), jnp.reshape(p["b"], (-1,))])
        flat = jnp.pad(flat, (0, self._flat_rows * LANES - self._flat_total))
        return jnp.reshape(flat, (self._flat_rows, LANES)).astype(jnp.float32)

    def _unflatten(self, f):
        flat = jnp.reshape(f, (-1,))[: self._flat_total]
        w = jnp.reshape(flat[: self.D * self.C], (self.D, self.C))
        b = flat[self.D * self.C:]
        return {"w": w, "b": b}

    def reset(self):
        self.params = dict(self.model_state)
        self.ema_params = dict(self.model_state)
        self.anchor_params = dict(self.model_state)
        self._src_flat = self._flatten(self.model_state)

    def forward(self, x):
        if self.episodic:
            self.reset()
        outputs = None
        for _ in range(self.steps):
            outputs = self.forward_and_adapt(x)
        return outputs

    def forward_and_adapt(self, x):
        B = x.shape[0]
        C = self.C
        x_flat = jnp.reshape(x, (B, -1)).astype(jnp.float32)   # NCHW row-major flatten

        # per-step randomness drawn outside the kernels (no in-kernel PRNG: interpret-safe)
        step_key = jax.random.fold_in(self._key, self._step)
        k_noise, k_restore = jax.random.split(step_key)
        noise = jax.random.normal(k_noise, (N_AUG, B, self.D), jnp.float32)

        # one fused Pallas launch: student forward + teacher forward + mean of N_AUG
        # clipped/noised augmented teacher forwards (single MXU matmul).
        fused = fused_forward(x_flat, noise,
                              self.params["w"], self.params["b"],
                              self.ema_params["w"], self.ema_params["b"])

        # single device->host sync: IAST percentiles, per-class replacement and the
        # anchor-confidence gate are host numpy in the reference as well.
        fused_np = np.asarray(fused)
        outputs_np = fused_np[:B, :C]
        standard_ema_np = fused_np[:B, C:2 * C]
        outputs_ema_np = fused_np[B:, C:2 * C].copy()

        probs = _softmax_np(outputs_np)
        anchor_prob = probs.max(axis=1)
        anchor_pred = probs.argmax(axis=1)
        ema_probs = _softmax_np(standard_ema_np)
        teacher_prob = ema_probs.max(axis=1)
        teacher_pred = ema_probs.argmax(axis=1)

        cls_thresh = IAST(NUM_CLASSES, teacher_prob, teacher_pred)
        for i in range(NUM_CLASSES):
            idx = np.where(anchor_pred == i)[0]
            # empty class -> mean is NaN in torch, comparison False -> skip
            if idx.size > 0 and anchor_prob[idx].mean() > cls_thresh[i]:
                outputs_ema_np[idx] = standard_ema_np[idx]
        outputs_ema = jnp.asarray(outputs_ema_np)

        # loss + SGD step (jitted pure-JAX twin; provides both loss value and gradients)
        loss, new_params = sgd_adapt(self.params, x_flat, outputs_ema, lr=float(self.lr))
        self.last_loss = loss   # device scalar; not forced to host to avoid an extra sync

        # fused EMA teacher update + stochastic restore in ONE Pallas launch over the
        # lane-dense packed parameter slab; rst < 0 disables restore.
        do_restore = bool(anchor_prob.mean() < 0.92)
        rst_eff = float(self.rst) if do_restore else -1.0
        rand_flat = jax.random.uniform(k_restore, (self._flat_rows, LANES), jnp.float32)
        ema_new, p_new = ema_and_restore(
            self._flatten(self.ema_params), self._flatten(new_params),
            self._src_flat, rand_flat,
            jnp.asarray([rst_eff], dtype=jnp.float32), alpha=float(self.mt))
        self.ema_params = self._unflatten(ema_new)
        self.params = self._unflatten(p_new)

        self._step += 1
        return outputs_ema


# ----------------------------------------------------------------------------
# main
# ----------------------------------------------------------------------------
if __name__ == "__main__":
    key = jax.random.PRNGKey(0)
    kx, kw = jax.random.split(key)

    B, C_IN, H, W = 8, 3, 16, 16
    D = C_IN * H * W

    # image-like inputs in [0, 1], NCHW as in PyTorch
    x = jax.random.uniform(kx, (B, C_IN, H, W), jnp.float32)

    # deterministic synthetic linear-classifier weights
    w = jax.random.normal(kw, (D, NUM_CLASSES), jnp.float32) * 0.05
    b = jnp.zeros((NUM_CLASSES,), jnp.float32)

    cotta = CoTTA({"w": w, "b": b}, steps=1, episodic=False,
                  mt_alpha=0.99, rst_m=0.1, ap=0.9)

    out = cotta.forward(x)
    out = jax.block_until_ready(out)

    assert out.shape == (B, NUM_CLASSES)
    assert bool(jnp.all(jnp.isfinite(out)))
    print("KERNEL_OK")
</pallas_src>

<mosaic_0001>
module attributes {stable_mosaic.version = 11 : i64} {
  func.func @_fused_forward_kernel(%arg0: memref<8x768xf32, #tpu.memory_space<vmem>>, %arg1: memref<32x8x768xf32, #tpu.memory_space<vmem>>, %arg2: memref<768x128xf32, #tpu.memory_space<vmem>>, %arg3: memref<1x128xf32, #tpu.memory_space<vmem>>, %arg4: memref<16x128xf32, #tpu.memory_space<vmem>>) attributes {dimension_semantics = [], scalar_prefetch = 0 : i64, scratch_operands = 0 : i64, tpu.core_type = #tpu.core_type<tc>} {
    %c0 = arith.constant 0 : index
    %c0_0 = arith.constant 0 : index
    %0 = vector.load %arg0[%c0, %c0_0] : memref<8x768xf32, #tpu.memory_space<vmem>>, vector<8x768xf32>
    %cst = arith.constant 0.000000e+00 : f32
    %cst_1 = arith.constant 1.000000e+00 : f32
    %1 = vector.broadcast %cst : f32 to vector<8x768xf32>
    %2 = arith.maximumf %1, %0 : vector<8x768xf32>
    %3 = vector.broadcast %cst_1 : f32 to vector<8x768xf32>
    %4 = arith.minimumf %3, %2 : vector<8x768xf32>
    %5 = vector.shape_cast %4 : vector<8x768xf32> to vector<1x8x768xf32>
    %c0_2 = arith.constant 0 : index
    %c0_3 = arith.constant 0 : index
    %c0_4 = arith.constant 0 : index
    %6 = vector.load %arg1[%c0_2, %c0_3, %c0_4] : memref<32x8x768xf32, #tpu.memory_space<vmem>>, vector<32x8x768xf32>
    %cst_5 = arith.constant 5.000000e-03 : f32
    %7 = vector.broadcast %cst_5 : f32 to vector<32x8x768xf32>
    %8 = arith.mulf %7, %6 : vector<32x8x768xf32>
    %9 = vector.broadcast %5 : vector<1x8x768xf32> to vector<32x8x768xf32>
    %10 = arith.addf %9, %8 : vector<32x8x768xf32>
    %cst_6 = arith.constant 0.000000e+00 : f32
    %cst_7 = arith.constant 1.000000e+00 : f32
    %11 = vector.broadcast %cst_6 : f32 to vector<32x8x768xf32>
    %12 = arith.maximumf %11, %10 : vector<32x8x768xf32>
    %13 = vector.broadcast %cst_7 : f32 to vector<32x8x768xf32>
    %14 = arith.minimumf %13, %12 : vector<32x8x768xf32>
    %cst_8 = arith.constant dense<0.000000e+00> : vector<8x768xf32>
    %15 = vector.multi_reduction <add>, %14, %cst_8 [0] : vector<32x8x768xf32> to vector<8x768xf32>
    %cst_9 = arith.constant 3.200000e+01 : f32
    %16 = vector.broadcast %cst_9 : f32 to vector<8x768xf32>
    %17 = arith.divf %15, %16 : vector<8x768xf32>
    %18 = tpu.concatenate %0, %17 in 0 : vector<8x768xf32>, vector<8x768xf32> -> vector<16x768xf32>
    %c0_10 = arith.constant 0 : index
    %c0_11 = arith.constant 0 : index
    %19 = vector.load %arg2[%c0_10, %c0_11] : memref<768x128xf32, #tpu.memory_space<vmem>>, vector<768x128xf32>
    %cst_12 = arith.constant dense<0.000000e+00> : vector<16x128xf32>
    %20 = tpu.matmul %18, %19, %cst_12 {dimension_numbers = #tpu.dot_dimension_numbers<[1], [0], [0], [1], [0, 0, 1, 1], [], []>} : vector<16x768xf32>, vector<768x128xf32>, vector<16x128xf32> -> vector<16x128xf32>
    %c0_13 = arith.constant 0 : index
    %c0_14 = arith.constant 0 : index
    %21 = vector.load %arg3[%c0_13, %c0_14] : memref<1x128xf32, #tpu.memory_space<vmem>>, vector<1x128xf32>
    %22 = vector.broadcast %21 : vector<1x128xf32> to vector<16x128xf32>
    %23 = arith.addf %20, %22 : vector<16x128xf32>
    %c0_15 = arith.constant 0 : index
    %c0_16 = arith.constant 0 : index
    %24 = vector.load %arg4[%c0_15, %c0_16] : memref<16x128xf32, #tpu.memory_space<vmem>>, vector<16x128xf32>
    tpu.vector_store %arg4[%c0_15, %c0_16], %23 {strides = array<i32>} : memref<16x128xf32, #tpu.memory_space<vmem>>, vector<16x128xf32>,
    return
  }
}

</mosaic_0001>

<llo_original>
// kernel: fused_forward.1
$region0: #{fused_forward.1}
  #allocation0 [shape = 'u32[]', space=smem, size = 0x4, offset = 0x4, fixed_abs, tag = 'smem constant byte address 0x4 - core index']
  #allocation1 [shape = 'u32[144,128]{1,0:T(1,128)}', space=vmem, size = 0x12000, scoped, tag = 'internal scratch']
  %s0 = inlined_call_operand.vmem [shape: f32[8,768], index: 0, kind: input, shape index: {}]
  %s1 = inlined_call_operand.vmem [shape: f32[32,8,768], index: 1, kind: input, shape index: {}]
  %s2 = inlined_call_operand.vmem [shape: f32[768,128], index: 2, kind: input, shape index: {}]
  %s3 = inlined_call_operand.vmem [shape: f32[1,128], index: 3, kind: input, shape index: {}]
  %s4 = inlined_call_operand.hbm [shape: f32[16,128], index: 4, kind: output, shape index: {}]
  %s5 = sld [smem:[#allocation0]]
  $region26: #{fused_forward.1} parent=0
    _
  %s7 = ssub.s32 1, %s5
  %s8 = scalar_select 0, %s7, %s5
  $region1: #{fused_forward.1} parent=0
    #allocation2 [shape = 'u8[8192]{0}', space=vmem, size = 0x2000, scoped, tag = 'output window, operand 0, single buffered']
    #allocation3 [shape = 's32[1]{0}', space=sflag, size = 0x4, scoped, tag = 'scoped memory for fused_forward.1']
    %9 = vsyncpa [#allocation3], 0
    // Predicated region
    $region2: #{fused_forward.1} parent=1 // pred_check
      _
    $region3: #{fused_forward.1} parent=1 // pred_check_branch
      %11 = sbr.rel (0) target = $region5
    $region4: #{fused_forward.1} parent=1 // pred_region
      _
    $region5: #{fused_forward.1} parent=1 // pred_fallthru
      _
    // Predicated region
    $region6: #{fused_forward.1} parent=1 // pred_check
      _
    $region7: #{fused_forward.1} parent=1 // pred_check_branch
      %13 = sbr.rel (0) target = $region9
    $region8: #{fused_forward.1} parent=1 // pred_region
      _
    $region9: #{fused_forward.1} parent=1 // pred_fallthru
      _
    // Predicated region
    $region10: #{fused_forward.1} parent=1 // pred_check
      _
    $region11: #{fused_forward.1} parent=1 // pred_check_branch
      %15 = sbr.rel (0) target = $region13
    $region12: #{fused_forward.1} parent=1 // pred_region
      _
    $region13: #{fused_forward.1} parent=1 // pred_fallthru
      _
    // Predicated region
    $region14: #{fused_forward.1} parent=1 // pred_check
      _
    $region15: #{fused_forward.1} parent=1 // pred_check_branch
      %17 = sbr.rel (0) target = $region17
    $region16: #{fused_forward.1} parent=1 // pred_region
      _
    $region17: #{fused_forward.1} parent=1 // pred_fallthru
      _
    %v18 = vld [vmem:[%s0] sm:$0xff]
    %v19 = vld [vmem:[%s0 + $0x8] sm:$0xff]
    %v20 = vld [vmem:[%s0 + $0x10] sm:$0xff]
    %v21 = vld [vmem:[%s0 + $0x18] sm:$0xff]
    %v22 = vld [vmem:[%s0 + $0x20] sm:$0xff]
    %v23 = vld [vmem:[%s0 + $0x28] sm:$0xff]
    %v24 = vmax.f32 %v18, 0.0
    %v25 = vmax.f32 %v19, 0.0
    %v26 = vmax.f32 %v20, 0.0
    %v27 = vmax.f32 %v21, 0.0
    %v28 = vmax.f32 %v22, 0.0
    %v29 = vmax.f32 %v23, 0.0
    %v30 = vmin.f32 %v24, 1.0
    %v31 = vmin.f32 %v25, 1.0
    %v32 = vmin.f32 %v26, 1.0
    %v33 = vmin.f32 %v27, 1.0
    %v34 = vmin.f32 %v28, 1.0
    %v35 = vmin.f32 %v29, 1.0
    %v36 = vld [vmem:[%s1] sm:$0xff]
    %v37 = vld [vmem:[%s1 + $0x8] sm:$0xff]
    %v38 = vld [vmem:[%s1 + $0x10] sm:$0xff]
    %v39 = vld [vmem:[%s1 + $0x18] sm:$0xff]
    %v40 = vld [vmem:[%s1 + $0x20] sm:$0xff]
    %v41 = vld [vmem:[%s1 + $0x28] sm:$0xff]
    %v42 = vld [vmem:[%s1 + $0x30] sm:$0xff]
    %v43 = vld [vmem:[%s1 + $0x38] sm:$0xff]
    %v44 = vld [vmem:[%s1 + $0x40] sm:$0xff]
    %v45 = vld [vmem:[%s1 + $0x48] sm:$0xff]
    %v46 = vld [vmem:[%s1 + $0x50] sm:$0xff]
    %v47 = vld [vmem:[%s1 + $0x58] sm:$0xff]
    %v48 = vld [vmem:[%s1 + $0x60] sm:$0xff]
    %v49 = vld [vmem:[%s1 + $0x68] sm:$0xff]
    %v50 = vld [vmem:[%s1 + $0x70] sm:$0xff]
    %v51 = vld [vmem:[%s1 + $0x78] sm:$0xff]
    %v52 = vld [vmem:[%s1 + $0x80] sm:$0xff]
    %v53 = vld [vmem:[%s1 + $0x88] sm:$0xff]
    %v54 = vld [vmem:[%s1 + $0x90] sm:$0xff]
    %v55 = vld [vmem:[%s1 + $0x98] sm:$0xff]
    %v56 = vld [vmem:[%s1 + $0xa0] sm:$0xff]
    %v57 = vld [vmem:[%s1 + $0xa8] sm:$0xff]
    %v58 = vld [vmem:[%s1 + $0xb0] sm:$0xff]
    %v59 = vld [vmem:[%s1 + $0xb8] sm:$0xff]
    %v60 = vld [vmem:[%s1 + $0xc0] sm:$0xff]
    %v61 = vld [vmem:[%s1 + $0xc8] sm:$0xff]
    %v62 = vld [vmem:[%s1 + $0xd0] sm:$0xff]
    %v63 = vld [vmem:[%s1 + $0xd8] sm:$0xff]
    %v64 = vld [vmem:[%s1 + $0xe0] sm:$0xff]
    %v65 = vld [vmem:[%s1 + $0xe8] sm:$0xff]
    %v66 = vld [vmem:[%s1 + $0xf0] sm:$0xff]
    %v67 = vld [vmem:[%s1 + $0xf8] sm:$0xff]
    %v68 = vld [vmem:[%s1 + $0x100] sm:$0xff]
    %v69 = vld [vmem:[%s1 + $0x108] sm:$0xff]
    %v70 = vld [vmem:[%s1 + $0x110] sm:$0xff]
    %v71 = vld [vmem:[%s1 + $0x118] sm:$0xff]
    %v72 = vld [vmem:[%s1 + $0x120] sm:$0xff]
    %v73 = vld [vmem:[%s1 + $0x128] sm:$0xff]
    %v74 = vld [vmem:[%s1 + $0x130] sm:$0xff]
    %v75 = vld [vmem:[%s1 + $0x138] sm:$0xff]
    %v76 = vld [vmem:[%s1 + $0x140] sm:$0xff]
    %v77 = vld [vmem:[%s1 + $0x148] sm:$0xff]
    %v78 = vld [vmem:[%s1 + $0x150] sm:$0xff]
    %v79 = vld [vmem:[%s1 + $0x158] sm:$0xff]
    %v80 = vld [vmem:[%s1 + $0x160] sm:$0xff]
    %v81 = vld [vmem:[%s1 + $0x168] sm:$0xff]
    %v82 = vld [vmem:[%s1 + $0x170] sm:$0xff]
    %v83 = vld [vmem:[%s1 + $0x178] sm:$0xff]
    %v84 = vld [vmem:[%s1 + $0x180] sm:$0xff]
    %v85 = vld [vmem:[%s1 + $0x188] sm:$0xff]
    %v86 = vld [vmem:[%s1 + $0x190] sm:$0xff]
    %v87 = vld [vmem:[%s1 + $0x198] sm:$0xff]
    %v88 = vld [vmem:[%s1 + $0x1a0] sm:$0xff]
    %v89 = vld [vmem:[%s1 + $0x1a8] sm:$0xff]
    %v90 = vld [vmem:[%s1 + $0x1b0] sm:$0xff]
    %v91 = vld [vmem:[%s1 + $0x1b8] sm:$0xff]
    %v92 = vld [vmem:[%s1 + $0x1c0] sm:$0xff]
    %v93 = vld [vmem:[%s1 + $0x1c8] sm:$0xff]
    %v94 = vld [vmem:[%s1 + $0x1d0] sm:$0xff]
    %v95 = vld [vmem:[%s1 + $0x1d8] sm:$0xff]
    %v96 = vld [vmem:[%s1 + $0x1e0] sm:$0xff]
    %v97 = vld [vmem:[%s1 + $0x1e8] sm:$0xff]
    %v98 = vld [vmem:[%s1 + $0x1f0] sm:$0xff]
    %v99 = vld [vmem:[%s1 + $0x1f8] sm:$0xff]
    %v100 = vld [vmem:[%s1 + $0x200] sm:$0xff]
    %v101 = vld [vmem:[%s1 + $0x208] sm:$0xff]
    %v102 = vld [vmem:[%s1 + $0x210] sm:$0xff]
    %v103 = vld [vmem:[%s1 + $0x218] sm:$0xff]
    %v104 = vld [vmem:[%s1 + $0x220] sm:$0xff]
    %v105 = vld [vmem:[%s1 + $0x228] sm:$0xff]
    %v106 = vld [vmem:[%s1 + $0x230] sm:$0xff]
    %v107 = vld [vmem:[%s1 + $0x238] sm:$0xff]
    %v108 = vld [vmem:[%s1 + $0x240] sm:$0xff]
    %v109 = vld [vmem:[%s1 + $0x248] sm:$0xff]
    %v110 = vld [vmem:[%s1 + $0x250] sm:$0xff]
    %v111 = vld [vmem:[%s1 + $0x258] sm:$0xff]
    %v112 = vld [vmem:[%s1 + $0x260] sm:$0xff]
    %v113 = vld [vmem:[%s1 + $0x268] sm:$0xff]
    %v114 = vld [vmem:[%s1 + $0x270] sm:$0xff]
    %v115 = vld [vmem:[%s1 + $0x278] sm:$0xff]
    %v116 = vld [vmem:[%s1 + $0x280] sm:$0xff]
    %v117 = vld [vmem:[%s1 + $0x288] sm:$0xff]
    %v118 = vld [vmem:[%s1 + $0x290] sm:$0xff]
    %v119 = vld [vmem:[%s1 + $0x298] sm:$0xff]
    %v120 = vld [vmem:[%s1 + $0x2a0] sm:$0xff]
    %v121 = vld [vmem:[%s1 + $0x2a8] sm:$0xff]
    %v122 = vld [vmem:[%s1 + $0x2b0] sm:$0xff]
    %v123 = vld [vmem:[%s1 + $0x2b8] sm:$0xff]
    %v124 = vld [vmem:[%s1 + $0x2c0] sm:$0xff]
    %v125 = vld [vmem:[%s1 + $0x2c8] sm:$0xff]
    %v126 = vld [vmem:[%s1 + $0x2d0] sm:$0xff]
    %v127 = vld [vmem:[%s1 + $0x2d8] sm:$0xff]
    %v128 = vld [vmem:[%s1 + $0x2e0] sm:$0xff]
    %v129 = vld [vmem:[%s1 + $0x2e8] sm:$0xff]
    %v130 = vld [vmem:[%s1 + $0x2f0] sm:$0xff]
    %v131 = vld [vmem:[%s1 + $0x2f8] sm:$0xff]
    %v132 = vld [vmem:[%s1 + $0x300] sm:$0xff]
    %v133 = vld [vmem:[%s1 + $0x308] sm:$0xff]
    %v134 = vld [vmem:[%s1 + $0x310] sm:$0xff]
    %v135 = vld [vmem:[%s1 + $0x318] sm:$0xff]
    %v136 = vld [vmem:[%s1 + $0x320] sm:$0xff]
    %v137 = vld [vmem:[%s1 + $0x328] sm:$0xff]
    %v138 = vld [vmem:[%s1 + $0x330] sm:$0xff]
    %v139 = vld [vmem:[%s1 + $0x338] sm:$0xff]
    %v140 = vld [vmem:[%s1 + $0x340] sm:$0xff]
    %v141 = vld [vmem:[%s1 + $0x348] sm:$0xff]
    %v142 = vld [vmem:[%s1 + $0x350] sm:$0xff]
    %v143 = vld [vmem:[%s1 + $0x358] sm:$0xff]
    %v144 = vld [vmem:[%s1 + $0x360] sm:$0xff]
    %v145 = vld [vmem:[%s1 + $0x368] sm:$0xff]
    %v146 = vld [vmem:[%s1 + $0x370] sm:$0xff]
    %v147 = vld [vmem:[%s1 + $0x378] sm:$0xff]
    %v148 = vld [vmem:[%s1 + $0x380] sm:$0xff]
    %v149 = vld [vmem:[%s1 + $0x388] sm:$0xff]
    %v150 = vld [vmem:[%s1 + $0x390] sm:$0xff]
    %v151 = vld [vmem:[%s1 + $0x398] sm:$0xff]
    %v152 = vld [vmem:[%s1 + $0x3a0] sm:$0xff]
    %v153 = vld [vmem:[%s1 + $0x3a8] sm:$0xff]
    %v154 = vld [vmem:[%s1 + $0x3b0] sm:$0xff]
    %v155 = vld [vmem:[%s1 + $0x3b8] sm:$0xff]
    %v156 = vld [vmem:[%s1 + $0x3c0] sm:$0xff]
    %v157 = vld [vmem:[%s1 + $0x3c8] sm:$0xff]
    %v158 = vld [vmem:[%s1 + $0x3d0] sm:$0xff]
    %v159 = vld [vmem:[%s1 + $0x3d8] sm:$0xff]
    %v160 = vld [vmem:[%s1 + $0x3e0] sm:$0xff]
    %v161 = vld [vmem:[%s1 + $0x3e8] sm:$0xff]
    %v162 = vld [vmem:[%s1 + $0x3f0] sm:$0xff]
    %v163 = vld [vmem:[%s1 + $0x3f8] sm:$0xff]
    %v164 = vld [vmem:[%s1 + $0x400] sm:$0xff]
    %v165 = vld [vmem:[%s1 + $0x408] sm:$0xff]
    %v166 = vld [vmem:[%s1 + $0x410] sm:$0xff]
    %v167 = vld [vmem:[%s1 + $0x418] sm:$0xff]
    %v168 = vld [vmem:[%s1 + $0x420] sm:$0xff]
    %v169 = vld [vmem:[%s1 + $0x428] sm:$0xff]
    %v170 = vld [vmem:[%s1 + $0x430] sm:$0xff]
    %v171 = vld [vmem:[%s1 + $0x438] sm:$0xff]
    %v172 = vld [vmem:[%s1 + $0x440] sm:$0xff]
    %v173 = vld [vmem:[%s1 + $0x448] sm:$0xff]
    %v174 = vld [vmem:[%s1 + $0x450] sm:$0xff]
    %v175 = vld [vmem:[%s1 + $0x458] sm:$0xff]
    %v176 = vld [vmem:[%s1 + $0x460] sm:$0xff]
    %v177 = vld [vmem:[%s1 + $0x468] sm:$0xff]
    %v178 = vld [vmem:[%s1 + $0x470] sm:$0xff]
    %v179 = vld [vmem:[%s1 + $0x478] sm:$0xff]
    %v180 = vld [vmem:[%s1 + $0x480] sm:$0xff]
    %v181 = vld [vmem:[%s1 + $0x488] sm:$0xff]
    %v182 = vld [vmem:[%s1 + $0x490] sm:$0xff]
    %v183 = vld [vmem:[%s1 + $0x498] sm:$0xff]
    %v184 = vld [vmem:[%s1 + $0x4a0] sm:$0xff]
    %v185 = vld [vmem:[%s1 + $0x4a8] sm:$0xff]
    %v186 = vld [vmem:[%s1 + $0x4b0] sm:$0xff]
    %v187 = vld [vmem:[%s1 + $0x4b8] sm:$0xff]
    %v188 = vld [vmem:[%s1 + $0x4c0] sm:$0xff]
    %v189 = vld [vmem:[%s1 + $0x4c8] sm:$0xff]
    %v190 = vld [vmem:[%s1 + $0x4d0] sm:$0xff]
    %v191 = vld [vmem:[%s1 + $0x4d8] sm:$0xff]
    %v192 = vld [vmem:[%s1 + $0x4e0] sm:$0xff]
    %v193 = vld [vmem:[%s1 + $0x4e8] sm:$0xff]
    %v194 = vld [vmem:[%s1 + $0x4f0] sm:$0xff]
    %v195 = vld [vmem:[%s1 + $0x4f8] sm:$0xff]
    %v196 = vld [vmem:[%s1 + $0x500] sm:$0xff]
    %v197 = vld [vmem:[%s1 + $0x508] sm:$0xff]
    %v198 = vld [vmem:[%s1 + $0x510] sm:$0xff]
    %v199 = vld [vmem:[%s1 + $0x518] sm:$0xff]
    %v200 = vld [vmem:[%s1 + $0x520] sm:$0xff]
    %v201 = vld [vmem:[%s1 + $0x528] sm:$0xff]
    %v202 = vld [vmem:[%s1 + $0x530] sm:$0xff]
    %v203 = vld [vmem:[%s1 + $0x538] sm:$0xff]
    %v204 = vld [vmem:[%s1 + $0x540] sm:$0xff]
    %v205 = vld [vmem:[%s1 + $0x548] sm:$0xff]
    %v206 = vld [vmem:[%s1 + $0x550] sm:$0xff]
    %v207 = vld [vmem:[%s1 + $0x558] sm:$0xff]
    %v208 = vld [vmem:[%s1 + $0x560] sm:$0xff]
    %v209 = vld [vmem:[%s1 + $0x568] sm:$0xff]
    %v210 = vld [vmem:[%s1 + $0x570] sm:$0xff]
    %v211 = vld [vmem:[%s1 + $0x578] sm:$0xff]
    %v212 = vld [vmem:[%s1 + $0x580] sm:$0xff]
    %v213 = vld [vmem:[%s1 + $0x588] sm:$0xff]
    %v214 = vld [vmem:[%s1 + $0x590] sm:$0xff]
    %v215 = vld [vmem:[%s1 + $0x598] sm:$0xff]
    %v216 = vld [vmem:[%s1 + $0x5a0] sm:$0xff]
    %v217 = vld [vmem:[%s1 + $0x5a8] sm:$0xff]
    %v218 = vld [vmem:[%s1 + $0x5b0] sm:$0xff]
    %v219 = vld [vmem:[%s1 + $0x5b8] sm:$0xff]
    %v220 = vld [vmem:[%s1 + $0x5c0] sm:$0xff]
    %v221 = vld [vmem:[%s1 + $0x5c8] sm:$0xff]
    %v222 = vld [vmem:[%s1 + $0x5d0] sm:$0xff]
    %v223 = vld [vmem:[%s1 + $0x5d8] sm:$0xff]
    %v224 = vld [vmem:[%s1 + $0x5e0] sm:$0xff]
    %v225 = vld [vmem:[%s1 + $0x5e8] sm:$0xff]
    %v226 = vld [vmem:[%s1 + $0x5f0] sm:$0xff]
    %v227 = vld [vmem:[%s1 + $0x5f8] sm:$0xff]
    %v228 = vmul.f32 %v36, 0.005
    %v229 = vmul.f32 %v37, 0.005
    %v230 = vmul.f32 %v38, 0.005
    %v231 = vmul.f32 %v39, 0.005
    %v232 = vmul.f32 %v40, 0.005
    %v233 = vmul.f32 %v41, 0.005
    %v234 = vmul.f32 %v42, 0.005
    %v235 = vmul.f32 %v43, 0.005
    %v236 = vmul.f32 %v44, 0.005
    %v237 = vmul.f32 %v45, 0.005
    %v238 = vmul.f32 %v46, 0.005
    %v239 = vmul.f32 %v47, 0.005
    %v240 = vmul.f32 %v48, 0.005
    %v241 = vmul.f32 %v49, 0.005
    %v242 = vmul.f32 %v50, 0.005
    %v243 = vmul.f32 %v51, 0.005
    %v244 = vmul.f32 %v52, 0.005
    %v245 = vmul.f32 %v53, 0.005
    %v246 = vmul.f32 %v54, 0.005
    %v247 = vmul.f32 %v55, 0.005
    %v248 = vmul.f32 %v56, 0.005
    %v249 = vmul.f32 %v57, 0.005
    %v250 = vmul.f32 %v58, 0.005
    %v251 = vmul.f32 %v59, 0.005
    %v252 = vmul.f32 %v60, 0.005
    %v253 = vmul.f32 %v61, 0.005
    %v254 = vmul.f32 %v62, 0.005
    %v255 = vmul.f32 %v63, 0.005
    %v256 = vmul.f32 %v64, 0.005
    %v257 = vmul.f32 %v65, 0.005
    %v258 = vmul.f32 %v66, 0.005
    %v259 = vmul.f32 %v67, 0.005
    %v260 = vmul.f32 %v68, 0.005
    %v261 = vmul.f32 %v69, 0.005
    %v262 = vmul.f32 %v70, 0.005
    %v263 = vmul.f32 %v71, 0.005
    %v264 = vmul.f32 %v72, 0.005
    %v265 = vmul.f32 %v73, 0.005
    %v266 = vmul.f32 %v74, 0.005
    %v267 = vmul.f32 %v75, 0.005
    %v268 = vmul.f32 %v76, 0.005
    %v269 = vmul.f32 %v77, 0.005
    %v270 = vmul.f32 %v78, 0.005
    %v271 = vmul.f32 %v79, 0.005
    %v272 = vmul.f32 %v80, 0.005
    %v273 = vmul.f32 %v81, 0.005
    %v274 = vmul.f32 %v82, 0.005
    %v275 = vmul.f32 %v83, 0.005
    %v276 = vmul.f32 %v84, 0.005
    %v277 = vmul.f32 %v85, 0.005
    %v278 = vmul.f32 %v86, 0.005
    %v279 = vmul.f32 %v87, 0.005
    %v280 = vmul.f32 %v88, 0.005
    %v281 = vmul.f32 %v89, 0.005
    %v282 = vmul.f32 %v90, 0.005
    %v283 = vmul.f32 %v91, 0.005
    %v284 = vmul.f32 %v92, 0.005
    %v285 = vmul.f32 %v93, 0.005
    %v286 = vmul.f32 %v94, 0.005
    %v287 = vmul.f32 %v95, 0.005
    %v288 = vmul.f32 %v96, 0.005
    %v289 = vmul.f32 %v97, 0.005
    %v290 = vmul.f32 %v98, 0.005
    %v291 = vmul.f32 %v99, 0.005
    %v292 = vmul.f32 %v100, 0.005
    %v293 = vmul.f32 %v101, 0.005
    %v294 = vmul.f32 %v102, 0.005
    %v295 = vmul.f32 %v103, 0.005
    %v296 = vmul.f32 %v104, 0.005
    %v297 = vmul.f32 %v105, 0.005
    %v298 = vmul.f32 %v106, 0.005
    %v299 = vmul.f32 %v107, 0.005
    %v300 = vmul.f32 %v108, 0.005
    %v301 = vmul.f32 %v109, 0.005
    %v302 = vmul.f32 %v110, 0.005
    %v303 = vmul.f32 %v111, 0.005
    %v304 = vmul.f32 %v112, 0.005
    %v305 = vmul.f32 %v113, 0.005
    %v306 = vmul.f32 %v114, 0.005
    %v307 = vmul.f32 %v115, 0.005
    %v308 = vmul.f32 %v116, 0.005
    %v309 = vmul.f32 %v117, 0.005
    %v310 = vmul.f32 %v118, 0.005
    %v311 = vmul.f32 %v119, 0.005
    %v312 = vmul.f32 %v120, 0.005
    %v313 = vmul.f32 %v121, 0.005
    %v314 = vmul.f32 %v122, 0.005
    %v315 = vmul.f32 %v123, 0.005
    %v316 = vmul.f32 %v124, 0.005
    %v317 = vmul.f32 %v125, 0.005
    %v318 = vmul.f32 %v126, 0.005
    %v319 = vmul.f32 %v127, 0.005
    %v320 = vmul.f32 %v128, 0.005
    %v321 = vmul.f32 %v129, 0.005
    %v322 = vmul.f32 %v130, 0.005
    %v323 = vmul.f32 %v131, 0.005
    %v324 = vmul.f32 %v132, 0.005
    %v325 = vmul.f32 %v133, 0.005
    %v326 = vmul.f32 %v134, 0.005
    %v327 = vmul.f32 %v135, 0.005
    %v328 = vmul.f32 %v136, 0.005
    %v329 = vmul.f32 %v137, 0.005
    %v330 = vmul.f32 %v138, 0.005
    %v331 = vmul.f32 %v139, 0.005
    %v332 = vmul.f32 %v140, 0.005
    %v333 = vmul.f32 %v141, 0.005
    %v334 = vmul.f32 %v142, 0.005
    %v335 = vmul.f32 %v143, 0.005
    %v336 = vmul.f32 %v144, 0.005
    %v337 = vmul.f32 %v145, 0.005
    %v338 = vmul.f32 %v146, 0.005
    %v339 = vmul.f32 %v147, 0.005
    %v340 = vmul.f32 %v148, 0.005
    %v341 = vmul.f32 %v149, 0.005
    %v342 = vmul.f32 %v150, 0.005
    %v343 = vmul.f32 %v151, 0.005
    %v344 = vmul.f32 %v152, 0.005
    %v345 = vmul.f32 %v153, 0.005
    %v346 = vmul.f32 %v154, 0.005
    %v347 = vmul.f32 %v155, 0.005
    %v348 = vmul.f32 %v156, 0.005
    %v349 = vmul.f32 %v157, 0.005
    %v350 = vmul.f32 %v158, 0.005
    %v351 = vmul.f32 %v159, 0.005
    %v352 = vmul.f32 %v160, 0.005
    %v353 = vmul.f32 %v161, 0.005
    %v354 = vmul.f32 %v162, 0.005
    %v355 = vmul.f32 %v163, 0.005
    %v356 = vmul.f32 %v164, 0.005
    %v357 = vmul.f32 %v165, 0.005
    %v358 = vmul.f32 %v166, 0.005
    %v359 = vmul.f32 %v167, 0.005
    %v360 = vmul.f32 %v168, 0.005
    %v361 = vmul.f32 %v169, 0.005
    %v362 = vmul.f32 %v170, 0.005
    %v363 = vmul.f32 %v171, 0.005
    %v364 = vmul.f32 %v172, 0.005
    %v365 = vmul.f32 %v173, 0.005
    %v366 = vmul.f32 %v174, 0.005
    %v367 = vmul.f32 %v175, 0.005
    %v368 = vmul.f32 %v176, 0.005
    %v369 = vmul.f32 %v177, 0.005
    %v370 = vmul.f32 %v178, 0.005
    %v371 = vmul.f32 %v179, 0.005
    %v372 = vmul.f32 %v180, 0.005
    %v373 = vmul.f32 %v181, 0.005
    %v374 = vmul.f32 %v182, 0.005
    %v375 = vmul.f32 %v183, 0.005
    %v376 = vmul.f32 %v184, 0.005
    %v377 = vmul.f32 %v185, 0.005
    %v378 = vmul.f32 %v186, 0.005
    %v379 = vmul.f32 %v187, 0.005
    %v380 = vmul.f32 %v188, 0.005
    %v381 = vmul.f32 %v189, 0.005
    %v382 = vmul.f32 %v190, 0.005
    %v383 = vmul.f32 %v191, 0.005
    %v384 = vmul.f32 %v192, 0.005
    %v385 = vmul.f32 %v193, 0.005
    %v386 = vmul.f32 %v194, 0.005
    %v387 = vmul.f32 %v195, 0.005
    %v388 = vmul.f32 %v196, 0.005
    %v389 = vmul.f32 %v197, 0.005
    %v390 = vmul.f32 %v198, 0.005
    %v391 = vmul.f32 %v199, 0.005
    %v392 = vmul.f32 %v200, 0.005
    %v393 = vmul.f32 %v201, 0.005
    %v394 = vmul.f32 %v202, 0.005
    %v395 = vmul.f32 %v203, 0.005
    %v396 = vmul.f32 %v204, 0.005
    %v397 = vmul.f32 %v205, 0.005
    %v398 = vmul.f32 %v206, 0.005
    %v399 = vmul.f32 %v207, 0.005
    %v400 = vmul.f32 %v208, 0.005
    %v401 = vmul.f32 %v209, 0.005
    %v402 = vmul.f32 %v210, 0.005
    %v403 = vmul.f32 %v211, 0.005
    %v404 = vmul.f32 %v212, 0.005
    %v405 = vmul.f32 %v213, 0.005
    %v406 = vmul.f32 %v214, 0.005
    %v407 = vmul.f32 %v215, 0.005
    %v408 = vmul.f32 %v216, 0.005
    %v409 = vmul.f32 %v217, 0.005
    %v410 = vmul.f32 %v218, 0.005
    %v411 = vmul.f32 %v219, 0.005
    %v412 = vmul.f32 %v220, 0.005
    %v413 = vmul.f32 %v221, 0.005
    %v414 = vmul.f32 %v222, 0.005
    %v415 = vmul.f32 %v223, 0.005
    %v416 = vmul.f32 %v224, 0.005
    %v417 = vmul.f32 %v225, 0.005
    %v418 = vmul.f32 %v226, 0.005
    %v419 = vmul.f32 %v227, 0.005
    %v420 = vadd.f32 %v30, %v228
    %v421 = vadd.f32 %v31, %v229
    %v422 = vadd.f32 %v32, %v230
    %v423 = vadd.f32 %v33, %v231
    %v424 = vadd.f32 %v34, %v232
    %v425 = vadd.f32 %v35, %v233
    %v426 = vadd.f32 %v30, %v234
    %v427 = vadd.f32 %v31, %v235
    %v428 = vadd.f32 %v32, %v236
    %v429 = vadd.f32 %v33, %v237
    %v430 = vadd.f32 %v34, %v238
    %v431 = vadd.f32 %v35, %v239
    %v432 = vadd.f32 %v30, %v240
    %v433 = vadd.f32 %v31, %v241
    %v434 = vadd.f32 %v32, %v242
    %v435 = vadd.f32 %v33, %v243
    %v436 = vadd.f32 %v34, %v244
    %v437 = vadd.f32 %v35, %v245
    %v438 = vadd.f32 %v30, %v246
    %v439 = vadd.f32 %v31, %v247
    %v440 = vadd.f32 %v32, %v248
    %v441 = vadd.f32 %v33, %v249
    %v442 = vadd.f32 %v34, %v250
    %v443 = vadd.f32 %v35, %v251
    %v444 = vadd.f32 %v30, %v252
    %v445 = vadd.f32 %v31, %v253
    %v446 = vadd.f32 %v32, %v254
    %v447 = vadd.f32 %v33, %v255
    %v448 = vadd.f32 %v34, %v256
    %v449 = vadd.f32 %v35, %v257
    %v450 = vadd.f32 %v30, %v258
    %v451 = vadd.f32 %v31, %v259
    %v452 = vadd.f32 %v32, %v260
    %v453 = vadd.f32 %v33, %v261
    %v454 = vadd.f32 %v34, %v262
    %v455 = vadd.f32 %v35, %v263
    %v456 = vadd.f32 %v30, %v264
    %v457 = vadd.f32 %v31, %v265
    %v458 = vadd.f32 %v32, %v266
    %v459 = vadd.f32 %v33, %v267
    %v460 = vadd.f32 %v34, %v268
    %v461 = vadd.f32 %v35, %v269
    %v462 = vadd.f32 %v30, %v270
    %v463 = vadd.f32 %v31, %v271
    %v464 = vadd.f32 %v32, %v272
    %v465 = vadd.f32 %v33, %v273
    %v466 = vadd.f32 %v34, %v274
    %v467 = vadd.f32 %v35, %v275
    %v468 = vadd.f32 %v30, %v276
    %v469 = vadd.f32 %v31, %v277
    %v470 = vadd.f32 %v32, %v278
    %v471 = vadd.f32 %v33, %v279
    %v472 = vadd.f32 %v34, %v280
    %v473 = vadd.f32 %v35, %v281
    %v474 = vadd.f32 %v30, %v282
    %v475 = vadd.f32 %v31, %v283
    %v476 = vadd.f32 %v32, %v284
    %v477 = vadd.f32 %v33, %v285
    %v478 = vadd.f32 %v34, %v286
    %v479 = vadd.f32 %v35, %v287
    %v480 = vadd.f32 %v30, %v288
    %v481 = vadd.f32 %v31, %v289
    %v482 = vadd.f32 %v32, %v290
    %v483 = vadd.f32 %v33, %v291
    %v484 = vadd.f32 %v34, %v292
    %v485 = vadd.f32 %v35, %v293
    %v486 = vadd.f32 %v30, %v294
    %v487 = vadd.f32 %v31, %v295
    %v488 = vadd.f32 %v32, %v296
    %v489 = vadd.f32 %v33, %v297
    %v490 = vadd.f32 %v34, %v298
    %v491 = vadd.f32 %v35, %v299
    %v492 = vadd.f32 %v30, %v300
    %v493 = vadd.f32 %v31, %v301
    %v494 = vadd.f32 %v32, %v302
    %v495 = vadd.f32 %v33, %v303
    %v496 = vadd.f32 %v34, %v304
    %v497 = vadd.f32 %v35, %v305
    %v498 = vadd.f32 %v30, %v306
    %v499 = vadd.f32 %v31, %v307
    %v500 = vadd.f32 %v32, %v308
    %v501 = vadd.f32 %v33, %v309
    %v502 = vadd.f32 %v34, %v310
    %v503 = vadd.f32 %v35, %v311
    %v504 = vadd.f32 %v30, %v312
    %v505 = vadd.f32 %v31, %v313
    %v506 = vadd.f32 %v32, %v314
    %v507 = vadd.f32 %v33, %v315
    %v508 = vadd.f32 %v34, %v316
    %v509 = vadd.f32 %v35, %v317
    %v510 = vadd.f32 %v30, %v318
    %v511 = vadd.f32 %v31, %v319
    %v512 = vadd.f32 %v32, %v320
    %v513 = vadd.f32 %v33, %v321
    %v514 = vadd.f32 %v34, %v322
    %v515 = vadd.f32 %v35, %v323
    %v516 = vadd.f32 %v30, %v324
    %v517 = vadd.f32 %v31, %v325
    %v518 = vadd.f32 %v32, %v326
    %v519 = vadd.f32 %v33, %v327
    %v520 = vadd.f32 %v34, %v328
    %v521 = vadd.f32 %v35, %v329
    %v522 = vadd.f32 %v30, %v330
    %v523 = vadd.f32 %v31, %v331
    %v524 = vadd.f32 %v32, %v332
    %v525 = vadd.f32 %v33, %v333
    %v526 = vadd.f32 %v34, %v334
    %v527 = vadd.f32 %v35, %v335
    %v528 = vadd.f32 %v30, %v336
    %v529 = vadd.f32 %v31, %v337
    %v530 = vadd.f32 %v32, %v338
    %v531 = vadd.f32 %v33, %v339
    %v532 = vadd.f32 %v34, %v340
    %v533 = vadd.f32 %v35, %v341
    %v534 = vadd.f32 %v30, %v342
    %v535 = vadd.f32 %v31, %v343
    %v536 = vadd.f32 %v32, %v344
    %v537 = vadd.f32 %v33, %v345
    %v538 = vadd.f32 %v34, %v346
    %v539 = vadd.f32 %v35, %v347
    %v540 = vadd.f32 %v30, %v348
    %v541 = vadd.f32 %v31, %v349
    %v542 = vadd.f32 %v32, %v350
    %v543 = vadd.f32 %v33, %v351
    %v544 = vadd.f32 %v34, %v352
    %v545 = vadd.f32 %v35, %v353
    %v546 = vadd.f32 %v30, %v354
    %v547 = vadd.f32 %v31, %v355
    %v548 = vadd.f32 %v32, %v356
    %v549 = vadd.f32 %v33, %v357
    %v550 = vadd.f32 %v34, %v358
    %v551 = vadd.f32 %v35, %v359
    %v552 = vadd.f32 %v30, %v360
    %v553 = vadd.f32 %v31, %v361
    %v554 = vadd.f32 %v32, %v362
    %v555 = vadd.f32 %v33, %v363
    %v556 = vadd.f32 %v34, %v364
    %v557 = vadd.f32 %v35, %v365
    %v558 = vadd.f32 %v30, %v366
    %v559 = vadd.f32 %v31, %v367
    %v560 = vadd.f32 %v32, %v368
    %v561 = vadd.f32 %v33, %v369
    %v562 = vadd.f32 %v34, %v370
    %v563 = vadd.f32 %v35, %v371
    %v564 = vadd.f32 %v30, %v372
    %v565 = vadd.f32 %v31, %v373
    %v566 = vadd.f32 %v32, %v374
    %v567 = vadd.f32 %v33, %v375
    %v568 = vadd.f32 %v34, %v376
    %v569 = vadd.f32 %v35, %v377
    %v570 = vadd.f32 %v30, %v378
    %v571 = vadd.f32 %v31, %v379
    %v572 = vadd.f32 %v32, %v380
    %v573 = vadd.f32 %v33, %v381
    %v574 = vadd.f32 %v34, %v382
    %v575 = vadd.f32 %v35, %v383
    %v576 = vadd.f32 %v30, %v384
    %v577 = vadd.f32 %v31, %v385
    %v578 = vadd.f32 %v32, %v386
    %v579 = vadd.f32 %v33, %v387
    %v580 = vadd.f32 %v34, %v388
    %v581 = vadd.f32 %v35, %v389
    %v582 = vadd.f32 %v30, %v390
    %v583 = vadd.f32 %v31, %v391
    %v584 = vadd.f32 %v32, %v392
    %v585 = vadd.f32 %v33, %v393
    %v586 = vadd.f32 %v34, %v394
    %v587 = vadd.f32 %v35, %v395
    %v588 = vadd.f32 %v30, %v396
    %v589 = vadd.f32 %v31, %v397
    %v590 = vadd.f32 %v32, %v398
    %v591 = vadd.f32 %v33, %v399
    %v592 = vadd.f32 %v34, %v400
    %v593 = vadd.f32 %v35, %v401
    %v594 = vadd.f32 %v30, %v402
    %v595 = vadd.f32 %v31, %v403
    %v596 = vadd.f32 %v32, %v404
    %v597 = vadd.f32 %v33, %v405
    %v598 = vadd.f32 %v34, %v406
    %v599 = vadd.f32 %v35, %v407
    %v600 = vadd.f32 %v30, %v408
    %v601 = vadd.f32 %v31, %v409
    %v602 = vadd.f32 %v32, %v410
    %v603 = vadd.f32 %v33, %v411
    %v604 = vadd.f32 %v34, %v412
    %v605 = vadd.f32 %v35, %v413
    %v606 = vadd.f32 %v30, %v414
    %v607 = vadd.f32 %v31, %v415
    %v608 = vadd.f32 %v32, %v416
    %v609 = vadd.f32 %v33, %v417
    %v610 = vadd.f32 %v34, %v418
    %v611 = vadd.f32 %v35, %v419
    %v612 = vmax.f32 %v420, 0.0
    %v613 = vmax.f32 %v421, 0.0
    %v614 = vmax.f32 %v422, 0.0
    %v615 = vmax.f32 %v423, 0.0
    %v616 = vmax.f32 %v424, 0.0
    %v617 = vmax.f32 %v425, 0.0
    %v618 = vmax.f32 %v426, 0.0
    %v619 = vmax.f32 %v427, 0.0
    %v620 = vmax.f32 %v428, 0.0
    %v621 = vmax.f32 %v429, 0.0
    %v622 = vmax.f32 %v430, 0.0
    %v623 = vmax.f32 %v431, 0.0
    %v624 = vmax.f32 %v432, 0.0
    %v625 = vmax.f32 %v433, 0.0
    %v626 = vmax.f32 %v434, 0.0
    %v627 = vmax.f32 %v435, 0.0
    %v628 = vmax.f32 %v436, 0.0
    %v629 = vmax.f32 %v437, 0.0
    %v630 = vmax.f32 %v438, 0.0
    %v631 = vmax.f32 %v439, 0.0
    %v632 = vmax.f32 %v440, 0.0
    %v633 = vmax.f32 %v441, 0.0
    %v634 = vmax.f32 %v442, 0.0
    %v635 = vmax.f32 %v443, 0.0
    %v636 = vmax.f32 %v444, 0.0
    %v637 = vmax.f32 %v445, 0.0
    %v638 = vmax.f32 %v446, 0.0
    %v639 = vmax.f32 %v447, 0.0
    %v640 = vmax.f32 %v448, 0.0
    %v641 = vmax.f32 %v449, 0.0
    %v642 = vmax.f32 %v450, 0.0
    %v643 = vmax.f32 %v451, 0.0
    %v644 = vmax.f32 %v452, 0.0
    %v645 = vmax.f32 %v453, 0.0
    %v646 = vmax.f32 %v454, 0.0
    %v647 = vmax.f32 %v455, 0.0
    %v648 = vmax.f32 %v456, 0.0
    %v649 = vmax.f32 %v457, 0.0
    %v650 = vmax.f32 %v458, 0.0
    %v651 = vmax.f32 %v459, 0.0
    %v652 = vmax.f32 %v460, 0.0
    %v653 = vmax.f32 %v461, 0.0
    %v654 = vmax.f32 %v462, 0.0
    %v655 = vmax.f32 %v463, 0.0
    %v656 = vmax.f32 %v464, 0.0
    %v657 = vmax.f32 %v465, 0.0
    %v658 = vmax.f32 %v466, 0.0
    %v659 = vmax.f32 %v467, 0.0
    %v660 = vmax.f32 %v468, 0.0
    %v661 = vmax.f32 %v469, 0.0
    %v662 = vmax.f32 %v470, 0.0
    %v663 = vmax.f32 %v471, 0.0
    %v664 = vmax.f32 %v472, 0.0
    %v665 = vmax.f32 %v473, 0.0
    %v666 = vmax.f32 %v474, 0.0
    %v667 = vmax.f32 %v475, 0.0
    %v668 = vmax.f32 %v476, 0.0
    %v669 = vmax.f32 %v477, 0.0
    %v670 = vmax.f32 %v478, 0.0
    %v671 = vmax.f32 %v479, 0.0
    %v672 = vmax.f32 %v480, 0.0
    %v673 = vmax.f32 %v481, 0.0
    %v674 = vmax.f32 %v482, 0.0
    %v675 = vmax.f32 %v483, 0.0
    %v676 = vmax.f32 %v484, 0.0
    %v677 = vmax.f32 %v485, 0.0
    %v678 = vmax.f32 %v486, 0.0
    %v679 = vmax.f32 %v487, 0.0
    %v680 = vmax.f32 %v488, 0.0
    %v681 = vmax.f32 %v489, 0.0
    %v682 = vmax.f32 %v490, 0.0
    %v683 = vmax.f32 %v491, 0.0
    %v684 = vmax.f32 %v492, 0.0
    %v685 = vmax.f32 %v493, 0.0
    %v686 = vmax.f32 %v494, 0.0
    %v687 = vmax.f32 %v495, 0.0
    %v688 = vmax.f32 %v496, 0.0
    %v689 = vmax.f32 %v497, 0.0
    %v690 = vmax.f32 %v498, 0.0
    %v691 = vmax.f32 %v499, 0.0
    %v692 = vmax.f32 %v500, 0.0
    %v693 = vmax.f32 %v501, 0.0
    %v694 = vmax.f32 %v502, 0.0
    %v695 = vmax.f32 %v503, 0.0
    %v696 = vmax.f32 %v504, 0.0
    %v697 = vmax.f32 %v505, 0.0
    %v698 = vmax.f32 %v506, 0.0
    %v699 = vmax.f32 %v507, 0.0
    %v700 = vmax.f32 %v508, 0.0
    %v701 = vmax.f32 %v509, 0.0
    %v702 = vmax.f32 %v510, 0.0
    %v703 = vmax.f32 %v511, 0.0
    %v704 = vmax.f32 %v512, 0.0
    %v705 = vmax.f32 %v513, 0.0
    %v706 = vmax.f32 %v514, 0.0
    %v707 = vmax.f32 %v515, 0.0
    %v708 = vmax.f32 %v516, 0.0
    %v709 = vmax.f32 %v517, 0.0
    %v710 = vmax.f32 %v518, 0.0
    %v711 = vmax.f32 %v519, 0.0
    %v712 = vmax.f32 %v520, 0.0
    %v713 = vmax.f32 %v521, 0.0
    %v714 = vmax.f32 %v522, 0.0
    %v715 = vmax.f32 %v523, 0.0
    %v716 = vmax.f32 %v524, 0.0
    %v717 = vmax.f32 %v525, 0.0
    %v718 = vmax.f32 %v526, 0.0
    %v719 = vmax.f32 %v527, 0.0
    %v720 = vmax.f32 %v528, 0.0
    %v721 = vmax.f32 %v529, 0.0
    %v722 = vmax.f32 %v530, 0.0
    %v723 = vmax.f32 %v531, 0.0
    %v724 = vmax.f32 %v532, 0.0
    %v725 = vmax.f32 %v533, 0.0
    %v726 = vmax.f32 %v534, 0.0
    %v727 = vmax.f32 %v535, 0.0
    %v728 = vmax.f32 %v536, 0.0
    %v729 = vmax.f32 %v537, 0.0
    %v730 = vmax.f32 %v538, 0.0
    %v731 = vmax.f32 %v539, 0.0
    %v732 = vmax.f32 %v540, 0.0
    %v733 = vmax.f32 %v541, 0.0
    %v734 = vmax.f32 %v542, 0.0
    %v735 = vmax.f32 %v543, 0.0
    %v736 = vmax.f32 %v544, 0.0
    %v737 = vmax.f32 %v545, 0.0
    %v738 = vmax.f32 %v546, 0.0
    %v739 = vmax.f32 %v547, 0.0
    %v740 = vmax.f32 %v548, 0.0
    %v741 = vmax.f32 %v549, 0.0
    %v742 = vmax.f32 %v550, 0.0
    %v743 = vmax.f32 %v551, 0.0
    %v744 = vmax.f32 %v552, 0.0
    %v745 = vmax.f32 %v553, 0.0
    %v746 = vmax.f32 %v554, 0.0
    %v747 = vmax.f32 %v555, 0.0
    %v748 = vmax.f32 %v556, 0.0
    %v749 = vmax.f32 %v557, 0.0
    %v750 = vmax.f32 %v558, 0.0
    %v751 = vmax.f32 %v559, 0.0
    %v752 = vmax.f32 %v560, 0.0
    %v753 = vmax.f32 %v561, 0.0
    %v754 = vmax.f32 %v562, 0.0
    %v755 = vmax.f32 %v563, 0.0
    %v756 = vmax.f32 %v564, 0.0
    %v757 = vmax.f32 %v565, 0.0
    %v758 = vmax.f32 %v566, 0.0
    %v759 = vmax.f32 %v567, 0.0
    %v760 = vmax.f32 %v568, 0.0
    %v761 = vmax.f32 %v569, 0.0
    %v762 = vmax.f32 %v570, 0.0
    %v763 = vmax.f32 %v571, 0.0
    %v764 = vmax.f32 %v572, 0.0
    %v765 = vmax.f32 %v573, 0.0
    %v766 = vmax.f32 %v574, 0.0
    %v767 = vmax.f32 %v575, 0.0
    %v768 = vmax.f32 %v576, 0.0
    %v769 = vmax.f32 %v577, 0.0
    %v770 = vmax.f32 %v578, 0.0
    %v771 = vmax.f32 %v579, 0.0
    %v772 = vmax.f32 %v580, 0.0
    %v773 = vmax.f32 %v581, 0.0
    %v774 = vmax.f32 %v582, 0.0
    %v775 = vmax.f32 %v583, 0.0
    %v776 = vmax.f32 %v584, 0.0
    %v777 = vmax.f32 %v585, 0.0
    %v778 = vmax.f32 %v586, 0.0
    %v779 = vmax.f32 %v587, 0.0
    %v780 = vmax.f32 %v588, 0.0
    %v781 = vmax.f32 %v589, 0.0
    %v782 = vmax.f32 %v590, 0.0
    %v783 = vmax.f32 %v591, 0.0
    %v784 = vmax.f32 %v592, 0.0
    %v785 = vmax.f32 %v593, 0.0
    %v786 = vmax.f32 %v594, 0.0
    %v787 = vmax.f32 %v595, 0.0
    %v788 = vmax.f32 %v596, 0.0
    %v789 = vmax.f32 %v597, 0.0
    %v790 = vmax.f32 %v598, 0.0
    %v791 = vmax.f32 %v599, 0.0
    %v792 = vmax.f32 %v600, 0.0
    %v793 = vmax.f32 %v601, 0.0
    %v794 = vmax.f32 %v602, 0.0
    %v795 = vmax.f32 %v603, 0.0
    %v796 = vmax.f32 %v604, 0.0
    %v797 = vmax.f32 %v605, 0.0
    %v798 = vmax.f32 %v606, 0.0
    %v799 = vmax.f32 %v607, 0.0
    %v800 = vmax.f32 %v608, 0.0
    %v801 = vmax.f32 %v609, 0.0
    %v802 = vmax.f32 %v610, 0.0
    %v803 = vmax.f32 %v611, 0.0
    %v804 = vmin.f32 %v612, 1.0
    %v805 = vmin.f32 %v613, 1.0
    %v806 = vmin.f32 %v614, 1.0
    %v807 = vmin.f32 %v615, 1.0
    %v808 = vmin.f32 %v616, 1.0
    %v809 = vmin.f32 %v617, 1.0
    %v810 = vmin.f32 %v618, 1.0
    %v811 = vmin.f32 %v619, 1.0
    %v812 = vmin.f32 %v620, 1.0
    %v813 = vmin.f32 %v621, 1.0
    %v814 = vmin.f32 %v622, 1.0
    %v815 = vmin.f32 %v623, 1.0
    %v816 = vmin.f32 %v624, 1.0
    %v817 = vmin.f32 %v625, 1.0
    %v818 = vmin.f32 %v626, 1.0
    %v819 = vmin.f32 %v627, 1.0
    %v820 = vmin.f32 %v628, 1.0
    %v821 = vmin.f32 %v629, 1.0
    %v822 = vmin.f32 %v630, 1.0
    %v823 = vmin.f32 %v631, 1.0
    %v824 = vmin.f32 %v632, 1.0
    %v825 = vmin.f32 %v633, 1.0
    %v826 = vmin.f32 %v634, 1.0
    %v827 = vmin.f32 %v635, 1.0
    %v828 = vmin.f32 %v636, 1.0
    %v829 = vmin.f32 %v637, 1.0
    %v830 = vmin.f32 %v638, 1.0
    %v831 = vmin.f32 %v639, 1.0
    %v832 = vmin.f32 %v640, 1.0
    %v833 = vmin.f32 %v641, 1.0
    %v834 = vmin.f32 %v642, 1.0
    %v835 = vmin.f32 %v643, 1.0
    %v836 = vmin.f32 %v644, 1.0
    %v837 = vmin.f32 %v645, 1.0
    %v838 = vmin.f32 %v646, 1.0
    %v839 = vmin.f32 %v647, 1.0
    %v840 = vmin.f32 %v648, 1.0
    %v841 = vmin.f32 %v649, 1.0
    %v842 = vmin.f32 %v650, 1.0
    %v843 = vmin.f32 %v651, 1.0
    %v844 = vmin.f32 %v652, 1.0
    %v845 = vmin.f32 %v653, 1.0
    %v846 = vmin.f32 %v654, 1.0
    %v847 = vmin.f32 %v655, 1.0
    %v848 = vmin.f32 %v656, 1.0
    %v849 = vmin.f32 %v657, 1.0
    %v850 = vmin.f32 %v658, 1.0
    %v851 = vmin.f32 %v659, 1.0
    %v852 = vmin.f32 %v660, 1.0
    %v853 = vmin.f32 %v661, 1.0
    %v854 = vmin.f32 %v662, 1.0
    %v855 = vmin.f32 %v663, 1.0
    %v856 = vmin.f32 %v664, 1.0
    %v857 = vmin.f32 %v665, 1.0
    %v858 = vmin.f32 %v666, 1.0
    %v859 = vmin.f32 %v667, 1.0
    %v860 = vmin.f32 %v668, 1.0
    %v861 = vmin.f32 %v669, 1.0
    %v862 = vmin.f32 %v670, 1.0
    %v863 = vmin.f32 %v671, 1.0
    %v864 = vmin.f32 %v672, 1.0
    %v865 = vmin.f32 %v673, 1.0
    %v866 = vmin.f32 %v674, 1.0
    %v867 = vmin.f32 %v675, 1.0
    %v868 = vmin.f32 %v676, 1.0
    %v869 = vmin.f32 %v677, 1.0
    %v870 = vmin.f32 %v678, 1.0
    %v871 = vmin.f32 %v679, 1.0
    %v872 = vmin.f32 %v680, 1.0
    %v873 = vmin.f32 %v681, 1.0
    %v874 = vmin.f32 %v682, 1.0
    %v875 = vmin.f32 %v683, 1.0
    %v876 = vmin.f32 %v684, 1.0
    %v877 = vmin.f32 %v685, 1.0
    %v878 = vmin.f32 %v686, 1.0
    %v879 = vmin.f32 %v687, 1.0
    %v880 = vmin.f32 %v688, 1.0
    %v881 = vmin.f32 %v689, 1.0
    %v882 = vmin.f32 %v690, 1.0
    %v883 = vmin.f32 %v691, 1.0
    %v884 = vmin.f32 %v692, 1.0
    %v885 = vmin.f32 %v693, 1.0
    %v886 = vmin.f32 %v694, 1.0
    %v887 = vmin.f32 %v695, 1.0
    %v888 = vmin.f32 %v696, 1.0
    %v889 = vmin.f32 %v697, 1.0
    %v890 = vmin.f32 %v698, 1.0
    %v891 = vmin.f32 %v699, 1.0
    %v892 = vmin.f32 %v700, 1.0
    %v893 = vmin.f32 %v701, 1.0
    %v894 = vmin.f32 %v702, 1.0
    %v895 = vmin.f32 %v703, 1.0
    %v896 = vmin.f32 %v704, 1.0
    %v897 = vmin.f32 %v705, 1.0
    %v898 = vmin.f32 %v706, 1.0
    %v899 = vmin.f32 %v707, 1.0
    %v900 = vmin.f32 %v708, 1.0
    %v901 = vmin.f32 %v709, 1.0
    %v902 = vmin.f32 %v710, 1.0
    %v903 = vmin.f32 %v711, 1.0
    %v904 = vmin.f32 %v712, 1.0
    %v905 = vmin.f32 %v713, 1.0
    %v906 = vmin.f32 %v714, 1.0
    %v907 = vmin.f32 %v715, 1.0
    %v908 = vmin.f32 %v716, 1.0
    %v909 = vmin.f32 %v717, 1.0
    %v910 = vmin.f32 %v718, 1.0
    %v911 = vmin.f32 %v719, 1.0
    %v912 = vmin.f32 %v720, 1.0
    %v913 = vmin.f32 %v721, 1.0
    %v914 = vmin.f32 %v722, 1.0
    %v915 = vmin.f32 %v723, 1.0
    %v916 = vmin.f32 %v724, 1.0
    %v917 = vmin.f32 %v725, 1.0
    %v918 = vmin.f32 %v726, 1.0
    %v919 = vmin.f32 %v727, 1.0
    %v920 = vmin.f32 %v728, 1.0
    %v921 = vmin.f32 %v729, 1.0
    %v922 = vmin.f32 %v730, 1.0
    %v923 = vmin.f32 %v731, 1.0
    %v924 = vmin.f32 %v732, 1.0
    %v925 = vmin.f32 %v733, 1.0
    %v926 = vmin.f32 %v734, 1.0
    %v927 = vmin.f32 %v735, 1.0
    %v928 = vmin.f32 %v736, 1.0
    %v929 = vmin.f32 %v737, 1.0
    %v930 = vmin.f32 %v738, 1.0
    %v931 = vmin.f32 %v739, 1.0
    %v932 = vmin.f32 %v740, 1.0
    %v933 = vmin.f32 %v741, 1.0
    %v934 = vmin.f32 %v742, 1.0
    %v935 = vmin.f32 %v743, 1.0
    %v936 = vmin.f32 %v744, 1.0
    %v937 = vmin.f32 %v745, 1.0
    %v938 = vmin.f32 %v746, 1.0
    %v939 = vmin.f32 %v747, 1.0
    %v940 = vmin.f32 %v748, 1.0
    %v941 = vmin.f32 %v749, 1.0
    %v942 = vmin.f32 %v750, 1.0
    %v943 = vmin.f32 %v751, 1.0
    %v944 = vmin.f32 %v752, 1.0
    %v945 = vmin.f32 %v753, 1.0
    %v946 = vmin.f32 %v754, 1.0
    %v947 = vmin.f32 %v755, 1.0
    %v948 = vmin.f32 %v756, 1.0
    %v949 = vmin.f32 %v757, 1.0
    %v950 = vmin.f32 %v758, 1.0
    %v951 = vmin.f32 %v759, 1.0
    %v952 = vmin.f32 %v760, 1.0
    %v953 = vmin.f32 %v761, 1.0
    %v954 = vmin.f32 %v762, 1.0
    %v955 = vmin.f32 %v763, 1.0
    %v956 = vmin.f32 %v764, 1.0
    %v957 = vmin.f32 %v765, 1.0
    %v958 = vmin.f32 %v766, 1.0
    %v959 = vmin.f32 %v767, 1.0
    %v960 = vmin.f32 %v768, 1.0
    %v961 = vmin.f32 %v769, 1.0
    %v962 = vmin.f32 %v770, 1.0
    %v963 = vmin.f32 %v771, 1.0
    %v964 = vmin.f32 %v772, 1.0
    %v965 = vmin.f32 %v773, 1.0
    %v966 = vmin.f32 %v774, 1.0
    %v967 = vmin.f32 %v775, 1.0
    %v968 = vmin.f32 %v776, 1.0
    %v969 = vmin.f32 %v777, 1.0
    %v970 = vmin.f32 %v778, 1.0
    %v971 = vmin.f32 %v779, 1.0
    %v972 = vmin.f32 %v780, 1.0
    %v973 = vmin.f32 %v781, 1.0
    %v974 = vmin.f32 %v782, 1.0
    %v975 = vmin.f32 %v783, 1.0
    %v976 = vmin.f32 %v784, 1.0
    %v977 = vmin.f32 %v785, 1.0
    %v978 = vmin.f32 %v786, 1.0
    %v979 = vmin.f32 %v787, 1.0
    %v980 = vmin.f32 %v788, 1.0
    %v981 = vmin.f32 %v789, 1.0
    %v982 = vmin.f32 %v790, 1.0
    %v983 = vmin.f32 %v791, 1.0
    %v984 = vmin.f32 %v792, 1.0
    %v985 = vmin.f32 %v793, 1.0
    %v986 = vmin.f32 %v794, 1.0
    %v987 = vmin.f32 %v795, 1.0
    %v988 = vmin.f32 %v796, 1.0
    %v989 = vmin.f32 %v797, 1.0
    %v990 = vmin.f32 %v798, 1.0
    %v991 = vmin.f32 %v799, 1.0
    %v992 = vmin.f32 %v800, 1.0
    %v993 = vmin.f32 %v801, 1.0
    %v994 = vmin.f32 %v802, 1.0
    %v995 = vmin.f32 %v803, 1.0
    %v996 = vadd.f32 %v804, %v810
    %v997 = vadd.f32 %v996, %v816
    %v998 = vadd.f32 %v997, %v822
    %v999 = vadd.f32 %v998, %v828
    %v1000 = vadd.f32 %v999, %v834
    %v1001 = vadd.f32 %v1000, %v840
    %v1002 = vadd.f32 %v1001, %v846
    %v1003 = vadd.f32 %v1002, %v852
    %v1004 = vadd.f32 %v1003, %v858
    %v1005 = vadd.f32 %v1004, %v864
    %v1006 = vadd.f32 %v1005, %v870
    %v1007 = vadd.f32 %v1006, %v876
    %v1008 = vadd.f32 %v1007, %v882
    %v1009 = vadd.f32 %v1008, %v888
    %v1010 = vadd.f32 %v1009, %v894
    %v1011 = vadd.f32 %v1010, %v900
    %v1012 = vadd.f32 %v1011, %v906
    %v1013 = vadd.f32 %v1012, %v912
    %v1014 = vadd.f32 %v1013, %v918
    %v1015 = vadd.f32 %v1014, %v924
    %v1016 = vadd.f32 %v1015, %v930
    %v1017 = vadd.f32 %v1016, %v936
    %v1018 = vadd.f32 %v1017, %v942
    %v1019 = vadd.f32 %v1018, %v948
    %v1020 = vadd.f32 %v1019, %v954
    %v1021 = vadd.f32 %v1020, %v960
    %v1022 = vadd.f32 %v1021, %v966
    %v1023 = vadd.f32 %v1022, %v972
    %v1024 = vadd.f32 %v1023, %v978
    %v1025 = vadd.f32 %v1024, %v984
    %v1026 = vadd.f32 %v1025, %v990
    %v1027 = vadd.f32 %v805, %v811
    %v1028 = vadd.f32 %v1027, %v817
    %v1029 = vadd.f32 %v1028, %v823
    %v1030 = vadd.f32 %v1029, %v829
    %v1031 = vadd.f32 %v1030, %v835
    %v1032 = vadd.f32 %v1031, %v841
    %v1033 = vadd.f32 %v1032, %v847
    %v1034 = vadd.f32 %v1033, %v853
    %v1035 = vadd.f32 %v1034, %v859
    %v1036 = vadd.f32 %v1035, %v865
    %v1037 = vadd.f32 %v1036, %v871
    %v1038 = vadd.f32 %v1037, %v877
    %v1039 = vadd.f32 %v1038, %v883
    %v1040 = vadd.f32 %v1039, %v889
    %v1041 = vadd.f32 %v1040, %v895
    %v1042 = vadd.f32 %v1041, %v901
    %v1043 = vadd.f32 %v1042, %v907
    %v1044 = vadd.f32 %v1043, %v913
    %v1045 = vadd.f32 %v1044, %v919
    %v1046 = vadd.f32 %v1045, %v925
    %v1047 = vadd.f32 %v1046, %v931
    %v1048 = vadd.f32 %v1047, %v937
    %v1049 = vadd.f32 %v1048, %v943
    %v1050 = vadd.f32 %v1049, %v949
    %v1051 = vadd.f32 %v1050, %v955
    %v1052 = vadd.f32 %v1051, %v961
    %v1053 = vadd.f32 %v1052, %v967
    %v1054 = vadd.f32 %v1053, %v973
    %v1055 = vadd.f32 %v1054, %v979
    %v1056 = vadd.f32 %v1055, %v985
    %v1057 = vadd.f32 %v1056, %v991
    %v1058 = vadd.f32 %v806, %v812
    %v1059 = vadd.f32 %v1058, %v818
    %v1060 = vadd.f32 %v1059, %v824
    %v1061 = vadd.f32 %v1060, %v830
    %v1062 = vadd.f32 %v1061, %v836
    %v1063 = vadd.f32 %v1062, %v842
    %v1064 = vadd.f32 %v1063, %v848
    %v1065 = vadd.f32 %v1064, %v854
    %v1066 = vadd.f32 %v1065, %v860
    %v1067 = vadd.f32 %v1066, %v866
    %v1068 = vadd.f32 %v1067, %v872
    %v1069 = vadd.f32 %v1068, %v878
    %v1070 = vadd.f32 %v1069, %v884
    %v1071 = vadd.f32 %v1070, %v890
    %v1072 = vadd.f32 %v1071, %v896
    %v1073 = vadd.f32 %v1072, %v902
    %v1074 = vadd.f32 %v1073, %v908
    %v1075 = vadd.f32 %v1074, %v914
    %v1076 = vadd.f32 %v1075, %v920
    %v1077 = vadd.f32 %v1076, %v926
    %v1078 = vadd.f32 %v1077, %v932
    %v1079 = vadd.f32 %v1078, %v938
    %v1080 = vadd.f32 %v1079, %v944
    %v1081 = vadd.f32 %v1080, %v950
    %v1082 = vadd.f32 %v1081, %v956
    %v1083 = vadd.f32 %v1082, %v962
    %v1084 = vadd.f32 %v1083, %v968
    %v1085 = vadd.f32 %v1084, %v974
    %v1086 = vadd.f32 %v1085, %v980
    %v1087 = vadd.f32 %v1086, %v986
    %v1088 = vadd.f32 %v1087, %v992
    %v1089 = vadd.f32 %v807, %v813
    %v1090 = vadd.f32 %v1089, %v819
    %v1091 = vadd.f32 %v1090, %v825
    %v1092 = vadd.f32 %v1091, %v831
    %v1093 = vadd.f32 %v1092, %v837
    %v1094 = vadd.f32 %v1093, %v843
    %v1095 = vadd.f32 %v1094, %v849
    %v1096 = vadd.f32 %v1095, %v855
    %v1097 = vadd.f32 %v1096, %v861
    %v1098 = vadd.f32 %v1097, %v867
    %v1099 = vadd.f32 %v1098, %v873
    %v1100 = vadd.f32 %v1099, %v879
    %v1101 = vadd.f32 %v1100, %v885
    %v1102 = vadd.f32 %v1101, %v891
    %v1103 = vadd.f32 %v1102, %v897
    %v1104 = vadd.f32 %v1103, %v903
    %v1105 = vadd.f32 %v1104, %v909
    %v1106 = vadd.f32 %v1105, %v915
    %v1107 = vadd.f32 %v1106, %v921
    %v1108 = vadd.f32 %v1107, %v927
    %v1109 = vadd.f32 %v1108, %v933
    %v1110 = vadd.f32 %v1109, %v939
    %v1111 = vadd.f32 %v1110, %v945
    %v1112 = vadd.f32 %v1111, %v951
    %v1113 = vadd.f32 %v1112, %v957
    %v1114 = vadd.f32 %v1113, %v963
    %v1115 = vadd.f32 %v1114, %v969
    %v1116 = vadd.f32 %v1115, %v975
    %v1117 = vadd.f32 %v1116, %v981
    %v1118 = vadd.f32 %v1117, %v987
    %v1119 = vadd.f32 %v1118, %v993
    %v1120 = vadd.f32 %v808, %v814
    %v1121 = vadd.f32 %v1120, %v820
    %v1122 = vadd.f32 %v1121, %v826
    %v1123 = vadd.f32 %v1122, %v832
    %v1124 = vadd.f32 %v1123, %v838
    %v1125 = vadd.f32 %v1124, %v844
    %v1126 = vadd.f32 %v1125, %v850
    %v1127 = vadd.f32 %v1126, %v856
    %v1128 = vadd.f32 %v1127, %v862
    %v1129 = vadd.f32 %v1128, %v868
    %v1130 = vadd.f32 %v1129, %v874
    %v1131 = vadd.f32 %v1130, %v880
    %v1132 = vadd.f32 %v1131, %v886
    %v1133 = vadd.f32 %v1132, %v892
    %v1134 = vadd.f32 %v1133, %v898
    %v1135 = vadd.f32 %v1134, %v904
    %v1136 = vadd.f32 %v1135, %v910
    %v1137 = vadd.f32 %v1136, %v916
    %v1138 = vadd.f32 %v1137, %v922
    %v1139 = vadd.f32 %v1138, %v928
    %v1140 = vadd.f32 %v1139, %v934
    %v1141 = vadd.f32 %v1140, %v940
    %v1142 = vadd.f32 %v1141, %v946
    %v1143 = vadd.f32 %v1142, %v952
    %v1144 = vadd.f32 %v1143, %v958
    %v1145 = vadd.f32 %v1144, %v964
    %v1146 = vadd.f32 %v1145, %v970
    %v1147 = vadd.f32 %v1146, %v976
    %v1148 = vadd.f32 %v1147, %v982
    %v1149 = vadd.f32 %v1148, %v988
    %v1150 = vadd.f32 %v1149, %v994
    %v1151 = vadd.f32 %v809, %v815
    %v1152 = vadd.f32 %v1151, %v821
    %v1153 = vadd.f32 %v1152, %v827
    %v1154 = vadd.f32 %v1153, %v833
    %v1155 = vadd.f32 %v1154, %v839
    %v1156 = vadd.f32 %v1155, %v845
    %v1157 = vadd.f32 %v1156, %v851
    %v1158 = vadd.f32 %v1157, %v857
    %v1159 = vadd.f32 %v1158, %v863
    %v1160 = vadd.f32 %v1159, %v869
    %v1161 = vadd.f32 %v1160, %v875
    %v1162 = vadd.f32 %v1161, %v881
    %v1163 = vadd.f32 %v1162, %v887
    %v1164 = vadd.f32 %v1163, %v893
    %v1165 = vadd.f32 %v1164, %v899
    %v1166 = vadd.f32 %v1165, %v905
    %v1167 = vadd.f32 %v1166, %v911
    %v1168 = vadd.f32 %v1167, %v917
    %v1169 = vadd.f32 %v1168, %v923
    %v1170 = vadd.f32 %v1169, %v929
    %v1171 = vadd.f32 %v1170, %v935
    %v1172 = vadd.f32 %v1171, %v941
    %v1173 = vadd.f32 %v1172, %v947
    %v1174 = vadd.f32 %v1173, %v953
    %v1175 = vadd.f32 %v1174, %v959
    %v1176 = vadd.f32 %v1175, %v965
    %v1177 = vadd.f32 %v1176, %v971
    %v1178 = vadd.f32 %v1177, %v977
    %v1179 = vadd.f32 %v1178, %v983
    %v1180 = vadd.f32 %v1179, %v989
    %v1181 = vadd.f32 %v1180, %v995
    %v1182 = vrcp.pop 32.0
    %v1183 = vmul.f32 %v1026, %v1182
    %v1184 = vmul.f32 %v1057, %v1182
    %v1185 = vmul.f32 %v1088, %v1182
    %v1186 = vmul.f32 %v1119, %v1182
    %v1187 = vmul.f32 %v1150, %v1182
    %v1188 = vmul.f32 %v1181, %v1182
    %v1189 = vld [vmem:[%s2] sm:$0xff]
    %v1190 = vld [vmem:[%s2 + $0x8] sm:$0xff]
    %v1191 = vld [vmem:[%s2 + $0x10] sm:$0xff]
    %v1192 = vld [vmem:[%s2 + $0x18] sm:$0xff]
    %v1193 = vld [vmem:[%s2 + $0x20] sm:$0xff]
    %v1194 = vld [vmem:[%s2 + $0x28] sm:$0xff]
    %v1195 = vld [vmem:[%s2 + $0x30] sm:$0xff]
    %v1196 = vld [vmem:[%s2 + $0x38] sm:$0xff]
    %v1197 = vld [vmem:[%s2 + $0x40] sm:$0xff]
    %v1198 = vld [vmem:[%s2 + $0x48] sm:$0xff]
    %v1199 = vld [vmem:[%s2 + $0x50] sm:$0xff]
    %v1200 = vld [vmem:[%s2 + $0x58] sm:$0xff]
    %v1201 = vld [vmem:[%s2 + $0x60] sm:$0xff]
    %v1202 = vld [vmem:[%s2 + $0x68] sm:$0xff]
    %v1203 = vld [vmem:[%s2 + $0x70] sm:$0xff]
    %v1204 = vld [vmem:[%s2 + $0x78] sm:$0xff]
    %v1205 = vld [vmem:[%s2 + $0x80] sm:$0xff]
    %v1206 = vld [vmem:[%s2 + $0x88] sm:$0xff]
    %v1207 = vld [vmem:[%s2 + $0x90] sm:$0xff]
    %v1208 = vld [vmem:[%s2 + $0x98] sm:$0xff]
    %v1209 = vld [vmem:[%s2 + $0xa0] sm:$0xff]
    %v1210 = vld [vmem:[%s2 + $0xa8] sm:$0xff]
    %v1211 = vld [vmem:[%s2 + $0xb0] sm:$0xff]
    %v1212 = vld [vmem:[%s2 + $0xb8] sm:$0xff]
    %v1213 = vld [vmem:[%s2 + $0xc0] sm:$0xff]
    %v1214 = vld [vmem:[%s2 + $0xc8] sm:$0xff]
    %v1215 = vld [vmem:[%s2 + $0xd0] sm:$0xff]
    %v1216 = vld [vmem:[%s2 + $0xd8] sm:$0xff]
    %v1217 = vld [vmem:[%s2 + $0xe0] sm:$0xff]
    %v1218 = vld [vmem:[%s2 + $0xe8] sm:$0xff]
    %v1219 = vld [vmem:[%s2 + $0xf0] sm:$0xff]
    %v1220 = vld [vmem:[%s2 + $0xf8] sm:$0xff]
    %v1221 = vld [vmem:[%s2 + $0x100] sm:$0xff]
    %v1222 = vld [vmem:[%s2 + $0x108] sm:$0xff]
    %v1223 = vld [vmem:[%s2 + $0x110] sm:$0xff]
    %v1224 = vld [vmem:[%s2 + $0x118] sm:$0xff]
    %v1225 = vld [vmem:[%s2 + $0x120] sm:$0xff]
    %v1226 = vld [vmem:[%s2 + $0x128] sm:$0xff]
    %v1227 = vld [vmem:[%s2 + $0x130] sm:$0xff]
    %v1228 = vld [vmem:[%s2 + $0x138] sm:$0xff]
    %v1229 = vld [vmem:[%s2 + $0x140] sm:$0xff]
    %v1230 = vld [vmem:[%s2 + $0x148] sm:$0xff]
    %v1231 = vld [vmem:[%s2 + $0x150] sm:$0xff]
    %v1232 = vld [vmem:[%s2 + $0x158] sm:$0xff]
    %v1233 = vld [vmem:[%s2 + $0x160] sm:$0xff]
    %v1234 = vld [vmem:[%s2 + $0x168] sm:$0xff]
    %v1235 = vld [vmem:[%s2 + $0x170] sm:$0xff]
    %v1236 = vld [vmem:[%s2 + $0x178] sm:$0xff]
    %v1237 = vld [vmem:[%s2 + $0x180] sm:$0xff]
    %v1238 = vld [vmem:[%s2 + $0x188] sm:$0xff]
    %v1239 = vld [vmem:[%s2 + $0x190] sm:$0xff]
    %v1240 = vld [vmem:[%s2 + $0x198] sm:$0xff]
    %v1241 = vld [vmem:[%s2 + $0x1a0] sm:$0xff]
    %v1242 = vld [vmem:[%s2 + $0x1a8] sm:$0xff]
    %v1243 = vld [vmem:[%s2 + $0x1b0] sm:$0xff]
    %v1244 = vld [vmem:[%s2 + $0x1b8] sm:$0xff]
    %v1245 = vld [vmem:[%s2 + $0x1c0] sm:$0xff]
    %v1246 = vld [vmem:[%s2 + $0x1c8] sm:$0xff]
    %v1247 = vld [vmem:[%s2 + $0x1d0] sm:$0xff]
    %v1248 = vld [vmem:[%s2 + $0x1d8] sm:$0xff]
    %v1249 = vld [vmem:[%s2 + $0x1e0] sm:$0xff]
    %v1250 = vld [vmem:[%s2 + $0x1e8] sm:$0xff]
    %v1251 = vld [vmem:[%s2 + $0x1f0] sm:$0xff]
    %v1252 = vld [vmem:[%s2 + $0x1f8] sm:$0xff]
    %v1253 = vld [vmem:[%s2 + $0x200] sm:$0xff]
    %v1254 = vld [vmem:[%s2 + $0x208] sm:$0xff]
    %v1255 = vld [vmem:[%s2 + $0x210] sm:$0xff]
    %v1256 = vld [vmem:[%s2 + $0x218] sm:$0xff]
    %v1257 = vld [vmem:[%s2 + $0x220] sm:$0xff]
    %v1258 = vld [vmem:[%s2 + $0x228] sm:$0xff]
    %v1259 = vld [vmem:[%s2 + $0x230] sm:$0xff]
    %v1260 = vld [vmem:[%s2 + $0x238] sm:$0xff]
    %v1261 = vld [vmem:[%s2 + $0x240] sm:$0xff]
    %v1262 = vld [vmem:[%s2 + $0x248] sm:$0xff]
    %v1263 = vld [vmem:[%s2 + $0x250] sm:$0xff]
    %v1264 = vld [vmem:[%s2 + $0x258] sm:$0xff]
    %v1265 = vld [vmem:[%s2 + $0x260] sm:$0xff]
    %v1266 = vld [vmem:[%s2 + $0x268] sm:$0xff]
    %v1267 = vld [vmem:[%s2 + $0x270] sm:$0xff]
    %v1268 = vld [vmem:[%s2 + $0x278] sm:$0xff]
    %v1269 = vld [vmem:[%s2 + $0x280] sm:$0xff]
    %v1270 = vld [vmem:[%s2 + $0x288] sm:$0xff]
    %v1271 = vld [vmem:[%s2 + $0x290] sm:$0xff]
    %v1272 = vld [vmem:[%s2 + $0x298] sm:$0xff]
    %v1273 = vld [vmem:[%s2 + $0x2a0] sm:$0xff]
    %v1274 = vld [vmem:[%s2 + $0x2a8] sm:$0xff]
    %v1275 = vld [vmem:[%s2 + $0x2b0] sm:$0xff]
    %v1276 = vld [vmem:[%s2 + $0x2b8] sm:$0xff]
    %v1277 = vld [vmem:[%s2 + $0x2c0] sm:$0xff]
    %v1278 = vld [vmem:[%s2 + $0x2c8] sm:$0xff]
    %v1279 = vld [vmem:[%s2 + $0x2d0] sm:$0xff]
    %v1280 = vld [vmem:[%s2 + $0x2d8] sm:$0xff]
    %v1281 = vld [vmem:[%s2 + $0x2e0] sm:$0xff]
    %v1282 = vld [vmem:[%s2 + $0x2e8] sm:$0xff]
    %v1283 = vld [vmem:[%s2 + $0x2f0] sm:$0xff]
    %v1284 = vld [vmem:[%s2 + $0x2f8] sm:$0xff]
    %v1285 = vld [vmem:[%s3] sm:$0x1]
    %v1287 = vlaneseq
    %v1288 = vshrl.u32 %v1287, 7
    %v1289 = vsub.s32 0, %v1288
    %v1290 = vrot.slane %v1285, %v1289
    %1292 = vmatprep.subr.mxu0 0.0
    %1293 = vmatpush1.msra.mxu0 %v1189
    %1294 = vmatprep.subr.mxu0 0.0
    %1295 = vmatpush1.msra.mxu0 %v1190
    %1296 = vmatprep.subr.mxu0 0.0
    %1297 = vmatpush1.msra.mxu0 %v1191
    %1298 = vmatprep.subr.mxu0 0.0
    %1299 = vmatpush1.msra.mxu0 %v1192
    %1300 = vmatprep.subr.mxu0 0.0
    %1301 = vmatpush1.msra.mxu0 %v1193
    %1302 = vmatprep.subr.mxu0 0.0
    %1303 = vmatpush1.msra.mxu0 %v1194
    %1304 = vmatprep.subr.mxu0 0.0
    %1305 = vmatpush1.msra.mxu0 %v1195
    %1306 = vmatprep.subr.mxu0 0.0
    %1307 = vmatpush1.msra.mxu0 %v1196
    %1308 = vmatprep.subr.mxu0 0.0
    %1309 = vmatpush1.msra.mxu0 %v1197
    %1310 = vmatprep.subr.mxu0 0.0
    %1311 = vmatpush1.msra.mxu0 %v1198
    %1312 = vmatprep.subr.mxu0 0.0
    %1313 = vmatpush1.msra.mxu0 %v1199
    %1314 = vmatprep.subr.mxu0 0.0
    %1315 = vmatpush1.msra.mxu0 %v1200
    %1316 = vmatprep.subr.mxu0 0.0
    %1317 = vmatpush1.msra.mxu0 %v1201
    %1318 = vmatprep.subr.mxu0 0.0
    %1319 = vmatpush1.msra.mxu0 %v1202
    %1320 = vmatprep.subr.mxu0 0.0
    %1321 = vmatpush1.msra.mxu0 %v1203
    %1322 = vmatprep.subr.mxu0 0.0
    %1323 = vmatpush1.msra.mxu0 %v1204
    %1324 = vmatprep.subr.mxu0 0.0
    %1325 = vmatpush1.msra.mxu0 %v1205
    %1326 = vmatprep.subr.mxu0 0.0
    %1327 = vmatpush1.msra.mxu0 %v1206
    %1328 = vmatprep.subr.mxu0 0.0
    %1329 = vmatpush1.msra.mxu0 %v1207
    %1330 = vmatprep.subr.mxu0 0.0
    %1331 = vmatpush1.msra.mxu0 %v1208
    %1332 = vmatprep.subr.mxu0 0.0
    %1333 = vmatpush1.msra.mxu0 %v1209
    %1334 = vmatprep.subr.mxu0 0.0
    %1335 = vmatpush1.msra.mxu0 %v1210
    %1336 = vmatprep.subr.mxu0 0.0
    %1337 = vmatpush1.msra.mxu0 %v1211
    %1338 = vmatprep.subr.mxu0 0.0
    %1339 = vmatpush1.msra.mxu0 %v1212
    %1340 = vmatprep.subr.mxu0 0.0
    %1341 = vmatpush1.msra.mxu0 %v1213
    %1342 = vmatprep.subr.mxu0 0.0
    %1343 = vmatpush1.msra.mxu0 %v1214
    %1344 = vmatprep.subr.mxu0 0.0
    %1345 = vmatpush1.msra.mxu0 %v1215
    %1346 = vmatprep.subr.mxu0 0.0
    %1347 = vmatpush1.msra.mxu0 %v1216
    %1348 = vmatprep.subr.mxu0 0.0
    %1349 = vmatpush1.msra.mxu0 %v1217
    %1350 = vmatprep.subr.mxu0 0.0
    %1351 = vmatpush1.msra.mxu0 %v1218
    %1352 = vmatprep.subr.mxu0 0.0
    %1353 = vmatpush1.msra.mxu0 %v1219
    %1354 = vmatprep.subr.mxu0 0.0
    %1355 = vmatpush1.msra.mxu0 %v1220
    %1356 = vmatprep.mubr.f32.mxu0 %v19
    %1357 = vmatmul.mubr.f32.gmra.mrb[0].mxu0 %v18
    %v1358 = vpop.f32.mrb[0].mxu0
    %v1359 = vadd.f32 %v1290, %v1358
    %v1360 = vpop.f32.mrb[0].mxu0
    %1361 = vmatprep.mubr.f32.mxu0 %v1184
    %1362 = vmatmul.mubr.f32.gmra.mrb[0].mxu0 %v1183
    %v1363 = vpop.f32.mrb[0].mxu0
    %v1364 = vadd.f32 %v1290, %v1363
    %v1365 = vpop.f32.mrb[0].mxu0
    %1366 = vdwg.mxu0
    %1367 = vmatprep.subr.mxu0 0.0
    %1368 = vmatpush1.msra.mxu0 %v1221
    %1369 = vmatprep.subr.mxu0 0.0
    %1370 = vmatpush1.msra.mxu0 %v1222
    %1371 = vmatprep.subr.mxu0 0.0
    %1372 = vmatpush1.msra.mxu0 %v1223
    %1373 = vmatprep.subr.mxu0 0.0
    %1374 = vmatpush1.msra.mxu0 %v1224
    %1375 = vmatprep.subr.mxu0 0.0
    %1376 = vmatpush1.msra.mxu0 %v1225
    %1377 = vmatprep.subr.mxu0 0.0
    %1378 = vmatpush1.msra.mxu0 %v1226
    %1379 = vmatprep.subr.mxu0 0.0
    %1380 = vmatpush1.msra.mxu0 %v1227
    %1381 = vmatprep.subr.mxu0 0.0
    %1382 = vmatpush1.msra.mxu0 %v1228
    %1383 = vmatprep.subr.mxu0 0.0
    %1384 = vmatpush1.msra.mxu0 %v1229
    %1385 = vmatprep.subr.mxu0 0.0
    %1386 = vmatpush1.msra.mxu0 %v1230
    %1387 = vmatprep.subr.mxu0 0.0
    %1388 = vmatpush1.msra.mxu0 %v1231
    %1389 = vmatprep.subr.mxu0 0.0
    %1390 = vmatpush1.msra.mxu0 %v1232
    %1391 = vmatprep.subr.mxu0 0.0
    %1392 = vmatpush1.msra.mxu0 %v1233
    %1393 = vmatprep.subr.mxu0 0.0
    %1394 = vmatpush1.msra.mxu0 %v1234
    %1395 = vmatprep.subr.mxu0 0.0
    %1396 = vmatpush1.msra.mxu0 %v1235
    %1397 = vmatprep.subr.mxu0 0.0
    %1398 = vmatpush1.msra.mxu0 %v1236
    %1399 = vmatprep.subr.mxu0 0.0
    %1400 = vmatpush1.msra.mxu0 %v1237
    %1401 = vmatprep.subr.mxu0 0.0
    %1402 = vmatpush1.msra.mxu0 %v1238
    %1403 = vmatprep.subr.mxu0 0.0
    %1404 = vmatpush1.msra.mxu0 %v1239
    %1405 = vmatprep.subr.mxu0 0.0
    %1406 = vmatpush1.msra.mxu0 %v1240
    %1407 = vmatprep.subr.mxu0 0.0
    %1408 = vmatpush1.msra.mxu0 %v1241
    %1409 = vmatprep.subr.mxu0 0.0
    %1410 = vmatpush1.msra.mxu0 %v1242
    %1411 = vmatprep.subr.mxu0 0.0
    %1412 = vmatpush1.msra.mxu0 %v1243
    %1413 = vmatprep.subr.mxu0 0.0
    %1414 = vmatpush1.msra.mxu0 %v1244
    %1415 = vmatprep.subr.mxu0 0.0
    %1416 = vmatpush1.msra.mxu0 %v1245
    %1417 = vmatprep.subr.mxu0 0.0
    %1418 = vmatpush1.msra.mxu0 %v1246
    %1419 = vmatprep.subr.mxu0 0.0
    %1420 = vmatpush1.msra.mxu0 %v1247
    %1421 = vmatprep.subr.mxu0 0.0
    %1422 = vmatpush1.msra.mxu0 %v1248
    %1423 = vmatprep.subr.mxu0 0.0
    %1424 = vmatpush1.msra.mxu0 %v1249
    %1425 = vmatprep.subr.mxu0 0.0
    %1426 = vmatpush1.msra.mxu0 %v1250
    %1427 = vmatprep.subr.mxu0 0.0
    %1428 = vmatpush1.msra.mxu0 %v1251
    %1429 = vmatprep.subr.mxu0 0.0
    %1430 = vmatpush1.msra.mxu0 %v1252
    %1431 = vmatprep.mubr.f32.mxu0 %v21
    %1432 = vmatmul.mubr.f32.gmra.mrb[0].mxu0 %v20
    %v1433 = vpop.f32.mrb[0].mxu0
    %v1434 = vadd.f32 %v1359, %v1433
    %v1435 = vpop.f32.mrb[0].mxu0
    %1436 = vmatprep.mubr.f32.mxu0 %v1186
    %1437 = vmatmul.mubr.f32.gmra.mrb[0].mxu0 %v1185
    %v1438 = vpop.f32.mrb[0].mxu0
    %v1439 = vadd.f32 %v1364, %v1438
    %v1440 = vpop.f32.mrb[0].mxu0
    %1441 = vdwg.mxu0
    %1442 = vmatprep.subr.mxu0 0.0
    %1443 = vmatpush1.msra.mxu0 %v1253
    %1444 = vmatprep.subr.mxu0 0.0
    %1445 = vmatpush1.msra.mxu0 %v1254
    %1446 = vmatprep.subr.mxu0 0.0
    %1447 = vmatpush1.msra.mxu0 %v1255
    %1448 = vmatprep.subr.mxu0 0.0
    %1449 = vmatpush1.msra.mxu0 %v1256
    %1450 = vmatprep.subr.mxu0 0.0
    %1451 = vmatpush1.msra.mxu0 %v1257
    %1452 = vmatprep.subr.mxu0 0.0
    %1453 = vmatpush1.msra.mxu0 %v1258
    %1454 = vmatprep.subr.mxu0 0.0
    %1455 = vmatpush1.msra.mxu0 %v1259
    %1456 = vmatprep.subr.mxu0 0.0
    %1457 = vmatpush1.msra.mxu0 %v1260
    %1458 = vmatprep.subr.mxu0 0.0
    %1459 = vmatpush1.msra.mxu0 %v1261
    %1460 = vmatprep.subr.mxu0 0.0
    %1461 = vmatpush1.msra.mxu0 %v1262
    %1462 = vmatprep.subr.mxu0 0.0
    %1463 = vmatpush1.msra.mxu0 %v1263
    %1464 = vmatprep.subr.mxu0 0.0
    %1465 = vmatpush1.msra.mxu0 %v1264
    %1466 = vmatprep.subr.mxu0 0.0
    %1467 = vmatpush1.msra.mxu0 %v1265
    %1468 = vmatprep.subr.mxu0 0.0
    %1469 = vmatpush1.msra.mxu0 %v1266
    %1470 = vmatprep.subr.mxu0 0.0
    %1471 = vmatpush1.msra.mxu0 %v1267
    %1472 = vmatprep.subr.mxu0 0.0
    %1473 = vmatpush1.msra.mxu0 %v1268
    %1474 = vmatprep.subr.mxu0 0.0
    %1475 = vmatpush1.msra.mxu0 %v1269
    %1476 = vmatprep.subr.mxu0 0.0
    %1477 = vmatpush1.msra.mxu0 %v1270
    %1478 = vmatprep.subr.mxu0 0.0
    %1479 = vmatpush1.msra.mxu0 %v1271
    %1480 = vmatprep.subr.mxu0 0.0
    %1481 = vmatpush1.msra.mxu0 %v1272
    %1482 = vmatprep.subr.mxu0 0.0
    %1483 = vmatpush1.msra.mxu0 %v1273
    %1484 = vmatprep.subr.mxu0 0.0
    %1485 = vmatpush1.msra.mxu0 %v1274
    %1486 = vmatprep.subr.mxu0 0.0
    %1487 = vmatpush1.msra.mxu0 %v1275
    %1488 = vmatprep.subr.mxu0 0.0
    %1489 = vmatpush1.msra.mxu0 %v1276
    %1490 = vmatprep.subr.mxu0 0.0
    %1491 = vmatpush1.msra.mxu0 %v1277
    %1492 = vmatprep.subr.mxu0 0.0
    %1493 = vmatpush1.msra.mxu0 %v1278
    %1494 = vmatprep.subr.mxu0 0.0
    %1495 = vmatpush1.msra.mxu0 %v1279
    %1496 = vmatprep.subr.mxu0 0.0
    %1497 = vmatpush1.msra.mxu0 %v1280
    %1498 = vmatprep.subr.mxu0 0.0
    %1499 = vmatpush1.msra.mxu0 %v1281
    %1500 = vmatprep.subr.mxu0 0.0
    %1501 = vmatpush1.msra.mxu0 %v1282
    %1502 = vmatprep.subr.mxu0 0.0
    %1503 = vmatpush1.msra.mxu0 %v1283
    %1504 = vmatprep.subr.mxu0 0.0
    %1505 = vmatpush1.msra.mxu0 %v1284
    %1506 = vmatprep.mubr.f32.mxu0 %v23
    %1507 = vmatmul.mubr.f32.gmra.mrb[0].mxu0 %v22
    %v1508 = vpop.f32.mrb[0].mxu0
    %v1509 = vadd.f32 %v1434, %v1508
    %v1510 = vpop.f32.mrb[0].mxu0
    %1511 = vmatprep.mubr.f32.mxu0 %v1188
    %1512 = vmatmul.mubr.f32.gmra.mrb[0].mxu0 %v1187
    %v1513 = vpop.f32.mrb[0].mxu0
    %v1514 = vadd.f32 %v1439, %v1513
    %v1515 = vpop.f32.mrb[0].mxu0
    %1516 = vdwg.mxu0
    %1517 = vst [vmem:[#allocation2] sm:$0xff] %v1509
    %1518 = vst [vmem:[#allocation2 + $0x8] sm:$0xff] %v1514
    // Predicated region
    $region18: #{fused_forward.1} parent=1 // pred_check
      _
    $region19: #{fused_forward.1} parent=1 // pred_check_branch
      %1520 = sbr.rel (0) target = $region21
    $region20: #{fused_forward.1} parent=1 // pred_region
      %s1522 = ssub.s32 256, 256
      %1523 = vsyncadd [#allocation3], %s1522
      %s1524 = sshll.u32 [#allocation2], 4
      %s1525 = int_to_ptr.vmem [resolvable:$true] %s1524
      %1530 = dma.vmem_to_hbm [thread:$0]  %s1525, 256, %s4, [#allocation3], 128, 128, 8
    $region21: #{fused_forward.1} parent=1 // pred_fallthru
      _
    // Predicated region
    $region22: #{fused_forward.1} parent=1 // pred_check
      _
    $region23: #{fused_forward.1} parent=1 // pred_check_branch
      %1532 = sbr.rel (0) target = $region25
    $region24: #{fused_forward.1} parent=1 // pred_region
      %1533 = dma.done [#allocation3], 256
    $region25: #{fused_forward.1} parent=1 // pred_fallthru
      _
    %1534 = vsyncpa [#allocation3], 1

</llo_original>
